<compile_context>
chip_gen: v7x
topology: tpu7x:2x2x1
jax: 0.10.0
libtpu: 0.0.40
codegen_flags: <defaults>
</compile_context>

<pallas_src>
import functools

import jax
import jax.numpy as jnp
import numpy as np
from jax.experimental import pallas as pl
from jax.experimental.pallas import tpu as pltpu

MAX_AGENTS = 5
KEY_DIM = 64     # key / query width
VAL_DIM = 128    # value width


def _round_up(x, m):
    return ((x + m - 1) // m) * m


_SQRT_2_OVER_PI = 0.7978845608028654


def _gelu_tanh(v):
    # TODO(synk): Mosaic has no guaranteed erf lowering, so the kernel uses the
    # tanh approximation of nn.GELU (max per-element deviation ~3e-4 vs erf).
    return 0.5 * v * (1.0 + jnp.tanh(_SQRT_2_OVER_PI * (v + 0.044715 * (v * v * v))))


# --------------------------------------------------------------------------- #
# Kernel
# --------------------------------------------------------------------------- #
def _lightmeta_kernel(x_ref, wqkv_ref, bqkv_ref, w1_ref, b1_ref, w2_ref, b2_ref,
                      out_ref, *, agent_dim):
    f32 = jnp.float32
    A = MAX_AGENTS
    x = x_ref[...].astype(f32)                                      # [TB, D]

    # Fused per-agent K/Q/V projections: one MXU matmul against the packed
    # block-diagonal weight.  Column layout: [K_0..K_4 | Q_0..Q_4 | V_0..V_4].
    qkv = (jnp.dot(x, wqkv_ref[...].astype(f32), preferred_element_type=f32)
           + bqkv_ref[...].astype(f32))                             # [TB, A*(2*KEY_DIM+VAL_DIM)]

    k_off = 0
    q_off = A * KEY_DIM
    v_off = 2 * A * KEY_DIM
    keys = [qkv[:, k_off + a * KEY_DIM: k_off + (a + 1) * KEY_DIM] for a in range(A)]
    queries = [qkv[:, q_off + a * KEY_DIM: q_off + (a + 1) * KEY_DIM] for a in range(A)]
    values = [qkv[:, v_off + a * VAL_DIM: v_off + (a + 1) * VAL_DIM] for a in range(A)]

    # Agent mask: (sum_d |agent features|) > 0.1, straight from the flat layout.
    masks = []
    for a in range(A):
        asum = jnp.sum(jnp.abs(x[:, a * agent_dim:(a + 1) * agent_dim]),
                       axis=-1, keepdims=True)                       # [TB, 1]
        masks.append(jnp.where(asum > 0.1, jnp.float32(1.0), jnp.float32(0.0)))

    inv_sqrt_d = 1.0 / (float(KEY_DIM) ** 0.5)

    # Attention over the (tiny) agent axis, batched over the whole row tile.
    contexts = []
    for i in range(A):
        s = [jnp.sum(queries[i] * keys[j], axis=-1, keepdims=True) * inv_sqrt_d
             for j in range(A)]                                      # 5 x [TB, 1]
        m = s[0]
        for j in range(1, A):
            m = jnp.maximum(m, s[j])
        e = [jnp.exp(s[j] - m) for j in range(A)]
        den = e[0]
        for j in range(1, A):
            den = den + e[j]
        inv_den = pl.reciprocal(den, approx=True)                    # EUP, not a VALU divide
        ctx = (e[0] * inv_den) * values[0]
        for j in range(1, A):
            ctx = ctx + (e[j] * inv_den) * values[j]
        contexts.append(ctx)                                         # [TB, VAL_DIM]

    # Masked mean pooling over agents.
    num = contexts[0] * masks[0]
    msum = masks[0]
    for a in range(1, A):
        num = num + contexts[a] * masks[a]
        msum = msum + masks[a]
    pooled = num * pl.reciprocal(msum + 1e-8, approx=True)           # [TB, VAL_DIM]

    # Fused heads: hidden = [post_attention hidden | value hidden | 0 pad],
    # output slab = [action_logits | value | 0 pad]   (lane-dense, >=128 wide).
    h1 = (jnp.dot(pooled, w1_ref[...].astype(f32), preferred_element_type=f32)
          + b1_ref[...].astype(f32))
    h1 = _gelu_tanh(h1)
    out = (jnp.dot(h1, w2_ref[...].astype(f32), preferred_element_type=f32)
           + b2_ref[...].astype(f32))
    out_ref[...] = out.astype(out_ref.dtype)


# --------------------------------------------------------------------------- #
# Host-side weight packing (PyTorch (out, in) layout in -> packed (in, out))
# --------------------------------------------------------------------------- #
def _block_diag(w, n):
    # w: [in, out]; returns the [n*in, n*out] block-diagonal repetition.
    r, c = w.shape
    out = jnp.zeros((n * r, n * c), w.dtype)
    for a in range(n):
        out = out.at[a * r:(a + 1) * r, a * c:(a + 1) * c].set(w)
    return out


def pack_params(params, output_dim):
    f32 = jnp.float32
    A = MAX_AGENTS

    wk = jnp.asarray(params["key_w"], f32).T       # [agent_dim, 64]
    wq = jnp.asarray(params["query_w"], f32).T     # [agent_dim, 64]
    wv = jnp.asarray(params["value_w"], f32).T     # [agent_dim, 128]
    bk = jnp.asarray(params["key_b"], f32)
    bq = jnp.asarray(params["query_b"], f32)
    bv = jnp.asarray(params["value_b"], f32)

    w_qkv = jnp.concatenate(
        [_block_diag(wk, A), _block_diag(wq, A), _block_diag(wv, A)], axis=1)
    b_qkv = jnp.concatenate([jnp.tile(bk, A), jnp.tile(bq, A), jnp.tile(bv, A)])[None, :]

    w_p1 = jnp.asarray(params["post1_w"], f32).T   # [128, 128]
    b_p1 = jnp.asarray(params["post1_b"], f32)
    w_p2 = jnp.asarray(params["post2_w"], f32).T   # [128, output_dim]
    b_p2 = jnp.asarray(params["post2_b"], f32)
    w_v1 = jnp.asarray(params["vhead1_w"], f32).T  # [128, 64]
    b_v1 = jnp.asarray(params["vhead1_b"], f32)
    w_v2 = jnp.asarray(params["vhead2_w"], f32).T  # [64, 1]
    b_v2 = jnp.asarray(params["vhead2_b"], f32)

    h_post, h_val = w_p1.shape[1], w_v1.shape[1]          # 128, 64
    h1p = _round_up(h_post + h_val, 128)                  # 256
    out_pad = _round_up(output_dim + 1, 128)              # lane-dense output width

    w1c = jnp.zeros((w_p1.shape[0], h1p), f32)
    w1c = w1c.at[:, :h_post].set(w_p1)
    w1c = w1c.at[:, h_post:h_post + h_val].set(w_v1)
    b1c = jnp.zeros((1, h1p), f32)
    b1c = b1c.at[0, :h_post].set(b_p1)
    b1c = b1c.at[0, h_post:h_post + h_val].set(b_v1)

    w2c = jnp.zeros((h1p, out_pad), f32)
    w2c = w2c.at[:h_post, :output_dim].set(w_p2)
    w2c = w2c.at[h_post:h_post + h_val, output_dim].set(w_v2[:, 0])
    b2c = jnp.zeros((1, out_pad), f32)
    b2c = b2c.at[0, :output_dim].set(b_p2)
    b2c = b2c.at[0, output_dim].set(b_v2[0])

    return dict(w_qkv=w_qkv, b_qkv=b_qkv, w1c=w1c, b1c=b1c, w2c=w2c, b2c=b2c,
                output_dim=int(output_dim), out_pad=int(out_pad))


# --------------------------------------------------------------------------- #
# Wrapper
# --------------------------------------------------------------------------- #
def light_meta_forward(packed, x):
    if x.ndim == 1:
        x = x[None, :]
    x = x.astype(jnp.float32)
    B, D = x.shape
    if D % MAX_AGENTS != 0:
        raise ValueError(f"input_dim ({D}) must be divisible by MAX_AGENTS ({MAX_AGENTS})")
    agent_dim = D // MAX_AGENTS
    output_dim = packed["output_dim"]
    out_pad = packed["out_pad"]

    # Batch tile: as large as 512 rows per grid step (small batches -> one tile).
    TB = min(512, _round_up(B, 8))
    B_pad = _round_up(B, TB)
    x_p = jnp.pad(x, ((0, B_pad - B), (0, 0)))

    kernel = functools.partial(_lightmeta_kernel, agent_dim=agent_dim)

    out = pl.pallas_call(
        kernel,
        out_shape=jax.ShapeDtypeStruct((B_pad, out_pad), jnp.float32),
        grid=(B_pad // TB,),
        in_specs=[
            pl.BlockSpec((TB, D), lambda i: (i, 0)),                      # x: batch-tiled
            pl.BlockSpec(packed["w_qkv"].shape, lambda i: (0, 0)),        # weights: VMEM-resident
            pl.BlockSpec(packed["b_qkv"].shape, lambda i: (0, 0)),
            pl.BlockSpec(packed["w1c"].shape, lambda i: (0, 0)),
            pl.BlockSpec(packed["b1c"].shape, lambda i: (0, 0)),
            pl.BlockSpec(packed["w2c"].shape, lambda i: (0, 0)),
            pl.BlockSpec(packed["b2c"].shape, lambda i: (0, 0)),
        ],
        out_specs=pl.BlockSpec((TB, out_pad), lambda i: (i, 0)),
        compiler_params=pltpu.CompilerParams(
            dimension_semantics=("parallel",),
            vmem_limit_bytes=48 * 1024 * 1024,
        ),
    )(x_p, packed["w_qkv"], packed["b_qkv"], packed["w1c"], packed["b1c"],
      packed["w2c"], packed["b2c"])

    action_logits = out[:B, :output_dim]
    value = out[:B, output_dim:output_dim + 1]
    return action_logits, value


# --------------------------------------------------------------------------- #
# Pure-JAX reference (mirrors the PyTorch module, exact erf GELU)
# --------------------------------------------------------------------------- #
def reference_forward(params, x):
    A = MAX_AGENTS
    B, D = x.shape
    agent_dim = D // A
    agents = x.reshape(B, A, agent_dim)
    keys = agents @ params["key_w"].T + params["key_b"]
    queries = agents @ params["query_w"].T + params["query_b"]
    values = agents @ params["value_w"].T + params["value_b"]
    scores = jnp.einsum("bqd,bkd->bqk", queries, keys) / (keys.shape[-1] ** 0.5)
    weights = jax.nn.softmax(scores, axis=-1)
    context = jnp.einsum("bqk,bkd->bqd", weights, values)
    mask = (jnp.sum(jnp.abs(agents), axis=-1, keepdims=True) > 0.1).astype(x.dtype)
    pooled = jnp.sum(context * mask, axis=1) / (jnp.sum(mask, axis=1) + 1e-8)
    h = jax.nn.gelu(pooled @ params["post1_w"].T + params["post1_b"], approximate=False)
    logits = h @ params["post2_w"].T + params["post2_b"]
    hv = jax.nn.gelu(pooled @ params["vhead1_w"].T + params["vhead1_b"], approximate=False)
    value = hv @ params["vhead2_w"].T + params["vhead2_b"]
    return logits, value


# --------------------------------------------------------------------------- #
# Demo
# --------------------------------------------------------------------------- #
if __name__ == "__main__":
    agent_dim = 8
    input_dim = MAX_AGENTS * agent_dim   # 40
    output_dim = 6
    batch = 4

    key = jax.random.PRNGKey(0)
    ks = jax.random.split(key, 8)

    def _linear_init(k, out_f, in_f):
        k1, k2 = jax.random.split(k)
        bound = 1.0 / np.sqrt(in_f)
        w = jax.random.uniform(k1, (out_f, in_f), jnp.float32, -bound, bound)
        b = jax.random.uniform(k2, (out_f,), jnp.float32, -bound, bound)
        return w, b

    params = {}
    params["key_w"], params["key_b"] = _linear_init(ks[0], 64, agent_dim)
    params["query_w"], params["query_b"] = _linear_init(ks[1], 64, agent_dim)
    params["value_w"], params["value_b"] = _linear_init(ks[2], 128, agent_dim)
    params["post1_w"], params["post1_b"] = _linear_init(ks[3], 128, 128)
    params["post2_w"], params["post2_b"] = _linear_init(ks[4], output_dim, 128)
    params["vhead1_w"], params["vhead1_b"] = _linear_init(ks[5], 64, 128)
    params["vhead2_w"], params["vhead2_b"] = _linear_init(ks[6], 1, 64)
    # Note: agent_relation (Linear(64, 64)) exists in the module but is unused
    # in forward(), so it is not part of the kernel.

    x = jax.random.normal(ks[7], (batch, input_dim), jnp.float32)

    packed = pack_params(params, output_dim)
    logits, value = light_meta_forward(packed, x)
    logits, value = jax.block_until_ready((logits, value))

    ref_logits, ref_value = reference_forward(params, x)
    np.testing.assert_allclose(np.asarray(logits), np.asarray(ref_logits),
                               atol=5e-2, rtol=5e-2)
    np.testing.assert_allclose(np.asarray(value), np.asarray(ref_value),
                               atol=5e-2, rtol=5e-2)

    print("KERNEL_OK")
</pallas_src>

<mosaic_0001>
module attributes {stable_mosaic.version = 11 : i64} {
  func.func @_lightmeta_kernel(%arg0: i32, %arg1: memref<8x40xf32, #tpu.memory_space<vmem>>, %arg2: memref<40x1280xf32, #tpu.memory_space<vmem>>, %arg3: memref<1x1280xf32, #tpu.memory_space<vmem>>, %arg4: memref<128x256xf32, #tpu.memory_space<vmem>>, %arg5: memref<1x256xf32, #tpu.memory_space<vmem>>, %arg6: memref<256x128xf32, #tpu.memory_space<vmem>>, %arg7: memref<1x128xf32, #tpu.memory_space<vmem>>, %arg8: memref<8x128xf32, #tpu.memory_space<vmem>>) attributes {dimension_semantics = [#tpu.dimension_semantics<parallel>], iteration_bounds = array<i64: 1>, scalar_prefetch = 0 : i64, scratch_operands = 0 : i64, tpu.core_type = #tpu.core_type<tc>, window_params = [{transform_indices = @transform_0, window_bounds = array<i64: 8, 40>}, {pipeline_mode = #tpu.pipeline_mode<synchronous>, transform_indices = @transform_1, window_bounds = array<i64: 40, 1280>}, {pipeline_mode = #tpu.pipeline_mode<synchronous>, transform_indices = @transform_2, window_bounds = array<i64: 1, 1280>}, {pipeline_mode = #tpu.pipeline_mode<synchronous>, transform_indices = @transform_3, window_bounds = array<i64: 128, 256>}, {pipeline_mode = #tpu.pipeline_mode<synchronous>, transform_indices = @transform_4, window_bounds = array<i64: 1, 256>}, {pipeline_mode = #tpu.pipeline_mode<synchronous>, transform_indices = @transform_5, window_bounds = array<i64: 256, 128>}, {pipeline_mode = #tpu.pipeline_mode<synchronous>, transform_indices = @transform_6, window_bounds = array<i64: 1, 128>}, {transform_indices = @transform_7, window_bounds = array<i64: 8, 128>}]} {
    %c0 = arith.constant 0 : index
    %c0_0 = arith.constant 0 : index
    %0 = vector.load %arg1[%c0, %c0_0] : memref<8x40xf32, #tpu.memory_space<vmem>>, vector<8x40xf32>
    %c0_1 = arith.constant 0 : index
    %c0_2 = arith.constant 0 : index
    %1 = vector.load %arg2[%c0_1, %c0_2] : memref<40x1280xf32, #tpu.memory_space<vmem>>, vector<40x1280xf32>
    %cst = arith.constant dense<0.000000e+00> : vector<8x1280xf32>
    %2 = tpu.matmul %0, %1, %cst {dimension_numbers = #tpu.dot_dimension_numbers<[1], [0], [0], [1], [0, 0, 1, 1], [], []>} : vector<8x40xf32>, vector<40x1280xf32>, vector<8x1280xf32> -> vector<8x1280xf32>
    %c0_3 = arith.constant 0 : index
    %c0_4 = arith.constant 0 : index
    %3 = vector.load %arg3[%c0_3, %c0_4] : memref<1x1280xf32, #tpu.memory_space<vmem>>, vector<1x1280xf32>
    %4 = vector.broadcast %3 : vector<1x1280xf32> to vector<8x1280xf32>
    %5 = arith.addf %2, %4 : vector<8x1280xf32>
    %6 = vector.extract_strided_slice %5 {offsets = [0, 0], sizes = [8, 64], strides = [1, 1]} : vector<8x1280xf32> to vector<8x64xf32>
    %7 = vector.extract_strided_slice %5 {offsets = [0, 64], sizes = [8, 64], strides = [1, 1]} : vector<8x1280xf32> to vector<8x64xf32>
    %8 = vector.extract_strided_slice %5 {offsets = [0, 128], sizes = [8, 64], strides = [1, 1]} : vector<8x1280xf32> to vector<8x64xf32>
    %9 = vector.extract_strided_slice %5 {offsets = [0, 192], sizes = [8, 64], strides = [1, 1]} : vector<8x1280xf32> to vector<8x64xf32>
    %10 = vector.extract_strided_slice %5 {offsets = [0, 256], sizes = [8, 64], strides = [1, 1]} : vector<8x1280xf32> to vector<8x64xf32>
    %11 = vector.extract_strided_slice %5 {offsets = [0, 320], sizes = [8, 64], strides = [1, 1]} : vector<8x1280xf32> to vector<8x64xf32>
    %12 = vector.extract_strided_slice %5 {offsets = [0, 384], sizes = [8, 64], strides = [1, 1]} : vector<8x1280xf32> to vector<8x64xf32>
    %13 = vector.extract_strided_slice %5 {offsets = [0, 448], sizes = [8, 64], strides = [1, 1]} : vector<8x1280xf32> to vector<8x64xf32>
    %14 = vector.extract_strided_slice %5 {offsets = [0, 512], sizes = [8, 64], strides = [1, 1]} : vector<8x1280xf32> to vector<8x64xf32>
    %15 = vector.extract_strided_slice %5 {offsets = [0, 576], sizes = [8, 64], strides = [1, 1]} : vector<8x1280xf32> to vector<8x64xf32>
    %16 = vector.extract_strided_slice %5 {offsets = [0, 640], sizes = [8, 128], strides = [1, 1]} : vector<8x1280xf32> to vector<8x128xf32>
    %17 = vector.extract_strided_slice %5 {offsets = [0, 768], sizes = [8, 128], strides = [1, 1]} : vector<8x1280xf32> to vector<8x128xf32>
    %18 = vector.extract_strided_slice %5 {offsets = [0, 896], sizes = [8, 128], strides = [1, 1]} : vector<8x1280xf32> to vector<8x128xf32>
    %19 = vector.extract_strided_slice %5 {offsets = [0, 1024], sizes = [8, 128], strides = [1, 1]} : vector<8x1280xf32> to vector<8x128xf32>
    %20 = vector.extract_strided_slice %5 {offsets = [0, 1152], sizes = [8, 128], strides = [1, 1]} : vector<8x1280xf32> to vector<8x128xf32>
    %21 = vector.extract_strided_slice %0 {offsets = [0, 0], sizes = [8, 8], strides = [1, 1]} : vector<8x40xf32> to vector<8x8xf32>
    %22 = math.absf %21 : vector<8x8xf32>
    %cst_5 = arith.constant dense<0.000000e+00> : vector<8xf32>
    %23 = vector.multi_reduction <add>, %22, %cst_5 [1] : vector<8x8xf32> to vector<8xf32>
    %24 = vector.shape_cast %23 : vector<8xf32> to vector<8x1xf32>
    %cst_6 = arith.constant 1.000000e-01 : f32
    %25 = vector.broadcast %cst_6 : f32 to vector<8x1xf32>
    %26 = arith.cmpf ogt, %24, %25 : vector<8x1xf32>
    %cst_7 = arith.constant 1.000000e+00 : f32
    %cst_8 = arith.constant 0.000000e+00 : f32
    %27 = vector.broadcast %cst_7 : f32 to vector<8x1xf32>
    %28 = vector.broadcast %cst_8 : f32 to vector<8x1xf32>
    %29 = arith.select %26, %27, %28 : vector<8x1xi1>, vector<8x1xf32>
    %30 = vector.extract_strided_slice %0 {offsets = [0, 8], sizes = [8, 8], strides = [1, 1]} : vector<8x40xf32> to vector<8x8xf32>
    %31 = math.absf %30 : vector<8x8xf32>
    %cst_9 = arith.constant dense<0.000000e+00> : vector<8xf32>
    %32 = vector.multi_reduction <add>, %31, %cst_9 [1] : vector<8x8xf32> to vector<8xf32>
    %33 = vector.shape_cast %32 : vector<8xf32> to vector<8x1xf32>
    %cst_10 = arith.constant 1.000000e-01 : f32
    %34 = vector.broadcast %cst_10 : f32 to vector<8x1xf32>
    %35 = arith.cmpf ogt, %33, %34 : vector<8x1xf32>
    %cst_11 = arith.constant 1.000000e+00 : f32
    %cst_12 = arith.constant 0.000000e+00 : f32
    %36 = vector.broadcast %cst_11 : f32 to vector<8x1xf32>
    %37 = vector.broadcast %cst_12 : f32 to vector<8x1xf32>
    %38 = arith.select %35, %36, %37 : vector<8x1xi1>, vector<8x1xf32>
    %39 = vector.extract_strided_slice %0 {offsets = [0, 16], sizes = [8, 8], strides = [1, 1]} : vector<8x40xf32> to vector<8x8xf32>
    %40 = math.absf %39 : vector<8x8xf32>
    %cst_13 = arith.constant dense<0.000000e+00> : vector<8xf32>
    %41 = vector.multi_reduction <add>, %40, %cst_13 [1] : vector<8x8xf32> to vector<8xf32>
    %42 = vector.shape_cast %41 : vector<8xf32> to vector<8x1xf32>
    %cst_14 = arith.constant 1.000000e-01 : f32
    %43 = vector.broadcast %cst_14 : f32 to vector<8x1xf32>
    %44 = arith.cmpf ogt, %42, %43 : vector<8x1xf32>
    %cst_15 = arith.constant 1.000000e+00 : f32
    %cst_16 = arith.constant 0.000000e+00 : f32
    %45 = vector.broadcast %cst_15 : f32 to vector<8x1xf32>
    %46 = vector.broadcast %cst_16 : f32 to vector<8x1xf32>
    %47 = arith.select %44, %45, %46 : vector<8x1xi1>, vector<8x1xf32>
    %48 = vector.extract_strided_slice %0 {offsets = [0, 24], sizes = [8, 8], strides = [1, 1]} : vector<8x40xf32> to vector<8x8xf32>
    %49 = math.absf %48 : vector<8x8xf32>
    %cst_17 = arith.constant dense<0.000000e+00> : vector<8xf32>
    %50 = vector.multi_reduction <add>, %49, %cst_17 [1] : vector<8x8xf32> to vector<8xf32>
    %51 = vector.shape_cast %50 : vector<8xf32> to vector<8x1xf32>
    %cst_18 = arith.constant 1.000000e-01 : f32
    %52 = vector.broadcast %cst_18 : f32 to vector<8x1xf32>
    %53 = arith.cmpf ogt, %51, %52 : vector<8x1xf32>
    %cst_19 = arith.constant 1.000000e+00 : f32
    %cst_20 = arith.constant 0.000000e+00 : f32
    %54 = vector.broadcast %cst_19 : f32 to vector<8x1xf32>
    %55 = vector.broadcast %cst_20 : f32 to vector<8x1xf32>
    %56 = arith.select %53, %54, %55 : vector<8x1xi1>, vector<8x1xf32>
    %57 = vector.extract_strided_slice %0 {offsets = [0, 32], sizes = [8, 8], strides = [1, 1]} : vector<8x40xf32> to vector<8x8xf32>
    %58 = math.absf %57 : vector<8x8xf32>
    %cst_21 = arith.constant dense<0.000000e+00> : vector<8xf32>
    %59 = vector.multi_reduction <add>, %58, %cst_21 [1] : vector<8x8xf32> to vector<8xf32>
    %60 = vector.shape_cast %59 : vector<8xf32> to vector<8x1xf32>
    %cst_22 = arith.constant 1.000000e-01 : f32
    %61 = vector.broadcast %cst_22 : f32 to vector<8x1xf32>
    %62 = arith.cmpf ogt, %60, %61 : vector<8x1xf32>
    %cst_23 = arith.constant 1.000000e+00 : f32
    %cst_24 = arith.constant 0.000000e+00 : f32
    %63 = vector.broadcast %cst_23 : f32 to vector<8x1xf32>
    %64 = vector.broadcast %cst_24 : f32 to vector<8x1xf32>
    %65 = arith.select %62, %63, %64 : vector<8x1xi1>, vector<8x1xf32>
    %66 = arith.mulf %11, %6 : vector<8x64xf32>
    %cst_25 = arith.constant dense<0.000000e+00> : vector<8xf32>
    %67 = vector.multi_reduction <add>, %66, %cst_25 [1] : vector<8x64xf32> to vector<8xf32>
    %68 = vector.shape_cast %67 : vector<8xf32> to vector<8x1xf32>
    %cst_26 = arith.constant 1.250000e-01 : f32
    %69 = vector.broadcast %cst_26 : f32 to vector<8x1xf32>
    %70 = arith.mulf %68, %69 : vector<8x1xf32>
    %71 = arith.mulf %11, %7 : vector<8x64xf32>
    %cst_27 = arith.constant dense<0.000000e+00> : vector<8xf32>
    %72 = vector.multi_reduction <add>, %71, %cst_27 [1] : vector<8x64xf32> to vector<8xf32>
    %73 = vector.shape_cast %72 : vector<8xf32> to vector<8x1xf32>
    %cst_28 = arith.constant 1.250000e-01 : f32
    %74 = vector.broadcast %cst_28 : f32 to vector<8x1xf32>
    %75 = arith.mulf %73, %74 : vector<8x1xf32>
    %76 = arith.mulf %11, %8 : vector<8x64xf32>
    %cst_29 = arith.constant dense<0.000000e+00> : vector<8xf32>
    %77 = vector.multi_reduction <add>, %76, %cst_29 [1] : vector<8x64xf32> to vector<8xf32>
    %78 = vector.shape_cast %77 : vector<8xf32> to vector<8x1xf32>
    %cst_30 = arith.constant 1.250000e-01 : f32
    %79 = vector.broadcast %cst_30 : f32 to vector<8x1xf32>
    %80 = arith.mulf %78, %79 : vector<8x1xf32>
    %81 = arith.mulf %11, %9 : vector<8x64xf32>
    %cst_31 = arith.constant dense<0.000000e+00> : vector<8xf32>
    %82 = vector.multi_reduction <add>, %81, %cst_31 [1] : vector<8x64xf32> to vector<8xf32>
    %83 = vector.shape_cast %82 : vector<8xf32> to vector<8x1xf32>
    %cst_32 = arith.constant 1.250000e-01 : f32
    %84 = vector.broadcast %cst_32 : f32 to vector<8x1xf32>
    %85 = arith.mulf %83, %84 : vector<8x1xf32>
    %86 = arith.mulf %11, %10 : vector<8x64xf32>
    %cst_33 = arith.constant dense<0.000000e+00> : vector<8xf32>
    %87 = vector.multi_reduction <add>, %86, %cst_33 [1] : vector<8x64xf32> to vector<8xf32>
    %88 = vector.shape_cast %87 : vector<8xf32> to vector<8x1xf32>
    %cst_34 = arith.constant 1.250000e-01 : f32
    %89 = vector.broadcast %cst_34 : f32 to vector<8x1xf32>
    %90 = arith.mulf %88, %89 : vector<8x1xf32>
    %91 = arith.maximumf %70, %75 : vector<8x1xf32>
    %92 = arith.maximumf %91, %80 : vector<8x1xf32>
    %93 = arith.maximumf %92, %85 : vector<8x1xf32>
    %94 = arith.maximumf %93, %90 : vector<8x1xf32>
    %95 = arith.subf %70, %94 : vector<8x1xf32>
    %96 = math.exp %95 : vector<8x1xf32>
    %97 = arith.subf %75, %94 : vector<8x1xf32>
    %98 = math.exp %97 : vector<8x1xf32>
    %99 = arith.subf %80, %94 : vector<8x1xf32>
    %100 = math.exp %99 : vector<8x1xf32>
    %101 = arith.subf %85, %94 : vector<8x1xf32>
    %102 = math.exp %101 : vector<8x1xf32>
    %103 = arith.subf %90, %94 : vector<8x1xf32>
    %104 = math.exp %103 : vector<8x1xf32>
    %105 = arith.addf %96, %98 : vector<8x1xf32>
    %106 = arith.addf %105, %100 : vector<8x1xf32>
    %107 = arith.addf %106, %102 : vector<8x1xf32>
    %108 = arith.addf %107, %104 : vector<8x1xf32>
    %109 = tpu.reciprocal %108 {approx = true} : vector<8x1xf32> -> vector<8x1xf32>
    %110 = arith.mulf %96, %109 : vector<8x1xf32>
    %111 = vector.broadcast %110 : vector<8x1xf32> to vector<8x128xf32>
    %112 = arith.mulf %111, %16 : vector<8x128xf32>
    %113 = arith.mulf %98, %109 : vector<8x1xf32>
    %114 = vector.broadcast %113 : vector<8x1xf32> to vector<8x128xf32>
    %115 = arith.mulf %114, %17 : vector<8x128xf32>
    %116 = arith.addf %112, %115 : vector<8x128xf32>
    %117 = arith.mulf %100, %109 : vector<8x1xf32>
    %118 = vector.broadcast %117 : vector<8x1xf32> to vector<8x128xf32>
    %119 = arith.mulf %118, %18 : vector<8x128xf32>
    %120 = arith.addf %116, %119 : vector<8x128xf32>
    %121 = arith.mulf %102, %109 : vector<8x1xf32>
    %122 = vector.broadcast %121 : vector<8x1xf32> to vector<8x128xf32>
    %123 = arith.mulf %122, %19 : vector<8x128xf32>
    %124 = arith.addf %120, %123 : vector<8x128xf32>
    %125 = arith.mulf %104, %109 : vector<8x1xf32>
    %126 = vector.broadcast %125 : vector<8x1xf32> to vector<8x128xf32>
    %127 = arith.mulf %126, %20 : vector<8x128xf32>
    %128 = arith.addf %124, %127 : vector<8x128xf32>
    %129 = arith.mulf %12, %6 : vector<8x64xf32>
    %cst_35 = arith.constant dense<0.000000e+00> : vector<8xf32>
    %130 = vector.multi_reduction <add>, %129, %cst_35 [1] : vector<8x64xf32> to vector<8xf32>
    %131 = vector.shape_cast %130 : vector<8xf32> to vector<8x1xf32>
    %cst_36 = arith.constant 1.250000e-01 : f32
    %132 = vector.broadcast %cst_36 : f32 to vector<8x1xf32>
    %133 = arith.mulf %131, %132 : vector<8x1xf32>
    %134 = arith.mulf %12, %7 : vector<8x64xf32>
    %cst_37 = arith.constant dense<0.000000e+00> : vector<8xf32>
    %135 = vector.multi_reduction <add>, %134, %cst_37 [1] : vector<8x64xf32> to vector<8xf32>
    %136 = vector.shape_cast %135 : vector<8xf32> to vector<8x1xf32>
    %cst_38 = arith.constant 1.250000e-01 : f32
    %137 = vector.broadcast %cst_38 : f32 to vector<8x1xf32>
    %138 = arith.mulf %136, %137 : vector<8x1xf32>
    %139 = arith.mulf %12, %8 : vector<8x64xf32>
    %cst_39 = arith.constant dense<0.000000e+00> : vector<8xf32>
    %140 = vector.multi_reduction <add>, %139, %cst_39 [1] : vector<8x64xf32> to vector<8xf32>
    %141 = vector.shape_cast %140 : vector<8xf32> to vector<8x1xf32>
    %cst_40 = arith.constant 1.250000e-01 : f32
    %142 = vector.broadcast %cst_40 : f32 to vector<8x1xf32>
    %143 = arith.mulf %141, %142 : vector<8x1xf32>
    %144 = arith.mulf %12, %9 : vector<8x64xf32>
    %cst_41 = arith.constant dense<0.000000e+00> : vector<8xf32>
    %145 = vector.multi_reduction <add>, %144, %cst_41 [1] : vector<8x64xf32> to vector<8xf32>
    %146 = vector.shape_cast %145 : vector<8xf32> to vector<8x1xf32>
    %cst_42 = arith.constant 1.250000e-01 : f32
    %147 = vector.broadcast %cst_42 : f32 to vector<8x1xf32>
    %148 = arith.mulf %146, %147 : vector<8x1xf32>
    %149 = arith.mulf %12, %10 : vector<8x64xf32>
    %cst_43 = arith.constant dense<0.000000e+00> : vector<8xf32>
    %150 = vector.multi_reduction <add>, %149, %cst_43 [1] : vector<8x64xf32> to vector<8xf32>
    %151 = vector.shape_cast %150 : vector<8xf32> to vector<8x1xf32>
    %cst_44 = arith.constant 1.250000e-01 : f32
    %152 = vector.broadcast %cst_44 : f32 to vector<8x1xf32>
    %153 = arith.mulf %151, %152 : vector<8x1xf32>
    %154 = arith.maximumf %133, %138 : vector<8x1xf32>
    %155 = arith.maximumf %154, %143 : vector<8x1xf32>
    %156 = arith.maximumf %155, %148 : vector<8x1xf32>
    %157 = arith.maximumf %156, %153 : vector<8x1xf32>
    %158 = arith.subf %133, %157 : vector<8x1xf32>
    %159 = math.exp %158 : vector<8x1xf32>
    %160 = arith.subf %138, %157 : vector<8x1xf32>
    %161 = math.exp %160 : vector<8x1xf32>
    %162 = arith.subf %143, %157 : vector<8x1xf32>
    %163 = math.exp %162 : vector<8x1xf32>
    %164 = arith.subf %148, %157 : vector<8x1xf32>
    %165 = math.exp %164 : vector<8x1xf32>
    %166 = arith.subf %153, %157 : vector<8x1xf32>
    %167 = math.exp %166 : vector<8x1xf32>
    %168 = arith.addf %159, %161 : vector<8x1xf32>
    %169 = arith.addf %168, %163 : vector<8x1xf32>
    %170 = arith.addf %169, %165 : vector<8x1xf32>
    %171 = arith.addf %170, %167 : vector<8x1xf32>
    %172 = tpu.reciprocal %171 {approx = true} : vector<8x1xf32> -> vector<8x1xf32>
    %173 = arith.mulf %159, %172 : vector<8x1xf32>
    %174 = vector.broadcast %173 : vector<8x1xf32> to vector<8x128xf32>
    %175 = arith.mulf %174, %16 : vector<8x128xf32>
    %176 = arith.mulf %161, %172 : vector<8x1xf32>
    %177 = vector.broadcast %176 : vector<8x1xf32> to vector<8x128xf32>
    %178 = arith.mulf %177, %17 : vector<8x128xf32>
    %179 = arith.addf %175, %178 : vector<8x128xf32>
    %180 = arith.mulf %163, %172 : vector<8x1xf32>
    %181 = vector.broadcast %180 : vector<8x1xf32> to vector<8x128xf32>
    %182 = arith.mulf %181, %18 : vector<8x128xf32>
    %183 = arith.addf %179, %182 : vector<8x128xf32>
    %184 = arith.mulf %165, %172 : vector<8x1xf32>
    %185 = vector.broadcast %184 : vector<8x1xf32> to vector<8x128xf32>
    %186 = arith.mulf %185, %19 : vector<8x128xf32>
    %187 = arith.addf %183, %186 : vector<8x128xf32>
    %188 = arith.mulf %167, %172 : vector<8x1xf32>
    %189 = vector.broadcast %188 : vector<8x1xf32> to vector<8x128xf32>
    %190 = arith.mulf %189, %20 : vector<8x128xf32>
    %191 = arith.addf %187, %190 : vector<8x128xf32>
    %192 = arith.mulf %13, %6 : vector<8x64xf32>
    %cst_45 = arith.constant dense<0.000000e+00> : vector<8xf32>
    %193 = vector.multi_reduction <add>, %192, %cst_45 [1] : vector<8x64xf32> to vector<8xf32>
    %194 = vector.shape_cast %193 : vector<8xf32> to vector<8x1xf32>
    %cst_46 = arith.constant 1.250000e-01 : f32
    %195 = vector.broadcast %cst_46 : f32 to vector<8x1xf32>
    %196 = arith.mulf %194, %195 : vector<8x1xf32>
    %197 = arith.mulf %13, %7 : vector<8x64xf32>
    %cst_47 = arith.constant dense<0.000000e+00> : vector<8xf32>
    %198 = vector.multi_reduction <add>, %197, %cst_47 [1] : vector<8x64xf32> to vector<8xf32>
    %199 = vector.shape_cast %198 : vector<8xf32> to vector<8x1xf32>
    %cst_48 = arith.constant 1.250000e-01 : f32
    %200 = vector.broadcast %cst_48 : f32 to vector<8x1xf32>
    %201 = arith.mulf %199, %200 : vector<8x1xf32>
    %202 = arith.mulf %13, %8 : vector<8x64xf32>
    %cst_49 = arith.constant dense<0.000000e+00> : vector<8xf32>
    %203 = vector.multi_reduction <add>, %202, %cst_49 [1] : vector<8x64xf32> to vector<8xf32>
    %204 = vector.shape_cast %203 : vector<8xf32> to vector<8x1xf32>
    %cst_50 = arith.constant 1.250000e-01 : f32
    %205 = vector.broadcast %cst_50 : f32 to vector<8x1xf32>
    %206 = arith.mulf %204, %205 : vector<8x1xf32>
    %207 = arith.mulf %13, %9 : vector<8x64xf32>
    %cst_51 = arith.constant dense<0.000000e+00> : vector<8xf32>
    %208 = vector.multi_reduction <add>, %207, %cst_51 [1] : vector<8x64xf32> to vector<8xf32>
    %209 = vector.shape_cast %208 : vector<8xf32> to vector<8x1xf32>
    %cst_52 = arith.constant 1.250000e-01 : f32
    %210 = vector.broadcast %cst_52 : f32 to vector<8x1xf32>
    %211 = arith.mulf %209, %210 : vector<8x1xf32>
    %212 = arith.mulf %13, %10 : vector<8x64xf32>
    %cst_53 = arith.constant dense<0.000000e+00> : vector<8xf32>
    %213 = vector.multi_reduction <add>, %212, %cst_53 [1] : vector<8x64xf32> to vector<8xf32>
    %214 = vector.shape_cast %213 : vector<8xf32> to vector<8x1xf32>
    %cst_54 = arith.constant 1.250000e-01 : f32
    %215 = vector.broadcast %cst_54 : f32 to vector<8x1xf32>
    %216 = arith.mulf %214, %215 : vector<8x1xf32>
    %217 = arith.maximumf %196, %201 : vector<8x1xf32>
    %218 = arith.maximumf %217, %206 : vector<8x1xf32>
    %219 = arith.maximumf %218, %211 : vector<8x1xf32>
    %220 = arith.maximumf %219, %216 : vector<8x1xf32>
    %221 = arith.subf %196, %220 : vector<8x1xf32>
    %222 = math.exp %221 : vector<8x1xf32>
    %223 = arith.subf %201, %220 : vector<8x1xf32>
    %224 = math.exp %223 : vector<8x1xf32>
    %225 = arith.subf %206, %220 : vector<8x1xf32>
    %226 = math.exp %225 : vector<8x1xf32>
    %227 = arith.subf %211, %220 : vector<8x1xf32>
    %228 = math.exp %227 : vector<8x1xf32>
    %229 = arith.subf %216, %220 : vector<8x1xf32>
    %230 = math.exp %229 : vector<8x1xf32>
    %231 = arith.addf %222, %224 : vector<8x1xf32>
    %232 = arith.addf %231, %226 : vector<8x1xf32>
    %233 = arith.addf %232, %228 : vector<8x1xf32>
    %234 = arith.addf %233, %230 : vector<8x1xf32>
    %235 = tpu.reciprocal %234 {approx = true} : vector<8x1xf32> -> vector<8x1xf32>
    %236 = arith.mulf %222, %235 : vector<8x1xf32>
    %237 = vector.broadcast %236 : vector<8x1xf32> to vector<8x128xf32>
    %238 = arith.mulf %237, %16 : vector<8x128xf32>
    %239 = arith.mulf %224, %235 : vector<8x1xf32>
    %240 = vector.broadcast %239 : vector<8x1xf32> to vector<8x128xf32>
    %241 = arith.mulf %240, %17 : vector<8x128xf32>
    %242 = arith.addf %238, %241 : vector<8x128xf32>
    %243 = arith.mulf %226, %235 : vector<8x1xf32>
    %244 = vector.broadcast %243 : vector<8x1xf32> to vector<8x128xf32>
    %245 = arith.mulf %244, %18 : vector<8x128xf32>
    %246 = arith.addf %242, %245 : vector<8x128xf32>
    %247 = arith.mulf %228, %235 : vector<8x1xf32>
    %248 = vector.broadcast %247 : vector<8x1xf32> to vector<8x128xf32>
    %249 = arith.mulf %248, %19 : vector<8x128xf32>
    %250 = arith.addf %246, %249 : vector<8x128xf32>
    %251 = arith.mulf %230, %235 : vector<8x1xf32>
    %252 = vector.broadcast %251 : vector<8x1xf32> to vector<8x128xf32>
    %253 = arith.mulf %252, %20 : vector<8x128xf32>
    %254 = arith.addf %250, %253 : vector<8x128xf32>
    %255 = arith.mulf %14, %6 : vector<8x64xf32>
    %cst_55 = arith.constant dense<0.000000e+00> : vector<8xf32>
    %256 = vector.multi_reduction <add>, %255, %cst_55 [1] : vector<8x64xf32> to vector<8xf32>
    %257 = vector.shape_cast %256 : vector<8xf32> to vector<8x1xf32>
    %cst_56 = arith.constant 1.250000e-01 : f32
    %258 = vector.broadcast %cst_56 : f32 to vector<8x1xf32>
    %259 = arith.mulf %257, %258 : vector<8x1xf32>
    %260 = arith.mulf %14, %7 : vector<8x64xf32>
    %cst_57 = arith.constant dense<0.000000e+00> : vector<8xf32>
    %261 = vector.multi_reduction <add>, %260, %cst_57 [1] : vector<8x64xf32> to vector<8xf32>
    %262 = vector.shape_cast %261 : vector<8xf32> to vector<8x1xf32>
    %cst_58 = arith.constant 1.250000e-01 : f32
    %263 = vector.broadcast %cst_58 : f32 to vector<8x1xf32>
    %264 = arith.mulf %262, %263 : vector<8x1xf32>
    %265 = arith.mulf %14, %8 : vector<8x64xf32>
    %cst_59 = arith.constant dense<0.000000e+00> : vector<8xf32>
    %266 = vector.multi_reduction <add>, %265, %cst_59 [1] : vector<8x64xf32> to vector<8xf32>
    %267 = vector.shape_cast %266 : vector<8xf32> to vector<8x1xf32>
    %cst_60 = arith.constant 1.250000e-01 : f32
    %268 = vector.broadcast %cst_60 : f32 to vector<8x1xf32>
    %269 = arith.mulf %267, %268 : vector<8x1xf32>
    %270 = arith.mulf %14, %9 : vector<8x64xf32>
    %cst_61 = arith.constant dense<0.000000e+00> : vector<8xf32>
    %271 = vector.multi_reduction <add>, %270, %cst_61 [1] : vector<8x64xf32> to vector<8xf32>
    %272 = vector.shape_cast %271 : vector<8xf32> to vector<8x1xf32>
    %cst_62 = arith.constant 1.250000e-01 : f32
    %273 = vector.broadcast %cst_62 : f32 to vector<8x1xf32>
    %274 = arith.mulf %272, %273 : vector<8x1xf32>
    %275 = arith.mulf %14, %10 : vector<8x64xf32>
    %cst_63 = arith.constant dense<0.000000e+00> : vector<8xf32>
    %276 = vector.multi_reduction <add>, %275, %cst_63 [1] : vector<8x64xf32> to vector<8xf32>
    %277 = vector.shape_cast %276 : vector<8xf32> to vector<8x1xf32>
    %cst_64 = arith.constant 1.250000e-01 : f32
    %278 = vector.broadcast %cst_64 : f32 to vector<8x1xf32>
    %279 = arith.mulf %277, %278 : vector<8x1xf32>
    %280 = arith.maximumf %259, %264 : vector<8x1xf32>
    %281 = arith.maximumf %280, %269 : vector<8x1xf32>
    %282 = arith.maximumf %281, %274 : vector<8x1xf32>
    %283 = arith.maximumf %282, %279 : vector<8x1xf32>
    %284 = arith.subf %259, %283 : vector<8x1xf32>
    %285 = math.exp %284 : vector<8x1xf32>
    %286 = arith.subf %264, %283 : vector<8x1xf32>
    %287 = math.exp %286 : vector<8x1xf32>
    %288 = arith.subf %269, %283 : vector<8x1xf32>
    %289 = math.exp %288 : vector<8x1xf32>
    %290 = arith.subf %274, %283 : vector<8x1xf32>
    %291 = math.exp %290 : vector<8x1xf32>
    %292 = arith.subf %279, %283 : vector<8x1xf32>
    %293 = math.exp %292 : vector<8x1xf32>
    %294 = arith.addf %285, %287 : vector<8x1xf32>
    %295 = arith.addf %294, %289 : vector<8x1xf32>
    %296 = arith.addf %295, %291 : vector<8x1xf32>
    %297 = arith.addf %296, %293 : vector<8x1xf32>
    %298 = tpu.reciprocal %297 {approx = true} : vector<8x1xf32> -> vector<8x1xf32>
    %299 = arith.mulf %285, %298 : vector<8x1xf32>
    %300 = vector.broadcast %299 : vector<8x1xf32> to vector<8x128xf32>
    %301 = arith.mulf %300, %16 : vector<8x128xf32>
    %302 = arith.mulf %287, %298 : vector<8x1xf32>
    %303 = vector.broadcast %302 : vector<8x1xf32> to vector<8x128xf32>
    %304 = arith.mulf %303, %17 : vector<8x128xf32>
    %305 = arith.addf %301, %304 : vector<8x128xf32>
    %306 = arith.mulf %289, %298 : vector<8x1xf32>
    %307 = vector.broadcast %306 : vector<8x1xf32> to vector<8x128xf32>
    %308 = arith.mulf %307, %18 : vector<8x128xf32>
    %309 = arith.addf %305, %308 : vector<8x128xf32>
    %310 = arith.mulf %291, %298 : vector<8x1xf32>
    %311 = vector.broadcast %310 : vector<8x1xf32> to vector<8x128xf32>
    %312 = arith.mulf %311, %19 : vector<8x128xf32>
    %313 = arith.addf %309, %312 : vector<8x128xf32>
    %314 = arith.mulf %293, %298 : vector<8x1xf32>
    %315 = vector.broadcast %314 : vector<8x1xf32> to vector<8x128xf32>
    %316 = arith.mulf %315, %20 : vector<8x128xf32>
    %317 = arith.addf %313, %316 : vector<8x128xf32>
    %318 = arith.mulf %15, %6 : vector<8x64xf32>
    %cst_65 = arith.constant dense<0.000000e+00> : vector<8xf32>
    %319 = vector.multi_reduction <add>, %318, %cst_65 [1] : vector<8x64xf32> to vector<8xf32>
    %320 = vector.shape_cast %319 : vector<8xf32> to vector<8x1xf32>
    %cst_66 = arith.constant 1.250000e-01 : f32
    %321 = vector.broadcast %cst_66 : f32 to vector<8x1xf32>
    %322 = arith.mulf %320, %321 : vector<8x1xf32>
    %323 = arith.mulf %15, %7 : vector<8x64xf32>
    %cst_67 = arith.constant dense<0.000000e+00> : vector<8xf32>
    %324 = vector.multi_reduction <add>, %323, %cst_67 [1] : vector<8x64xf32> to vector<8xf32>
    %325 = vector.shape_cast %324 : vector<8xf32> to vector<8x1xf32>
    %cst_68 = arith.constant 1.250000e-01 : f32
    %326 = vector.broadcast %cst_68 : f32 to vector<8x1xf32>
    %327 = arith.mulf %325, %326 : vector<8x1xf32>
    %328 = arith.mulf %15, %8 : vector<8x64xf32>
    %cst_69 = arith.constant dense<0.000000e+00> : vector<8xf32>
    %329 = vector.multi_reduction <add>, %328, %cst_69 [1] : vector<8x64xf32> to vector<8xf32>
    %330 = vector.shape_cast %329 : vector<8xf32> to vector<8x1xf32>
    %cst_70 = arith.constant 1.250000e-01 : f32
    %331 = vector.broadcast %cst_70 : f32 to vector<8x1xf32>
    %332 = arith.mulf %330, %331 : vector<8x1xf32>
    %333 = arith.mulf %15, %9 : vector<8x64xf32>
    %cst_71 = arith.constant dense<0.000000e+00> : vector<8xf32>
    %334 = vector.multi_reduction <add>, %333, %cst_71 [1] : vector<8x64xf32> to vector<8xf32>
    %335 = vector.shape_cast %334 : vector<8xf32> to vector<8x1xf32>
    %cst_72 = arith.constant 1.250000e-01 : f32
    %336 = vector.broadcast %cst_72 : f32 to vector<8x1xf32>
    %337 = arith.mulf %335, %336 : vector<8x1xf32>
    %338 = arith.mulf %15, %10 : vector<8x64xf32>
    %cst_73 = arith.constant dense<0.000000e+00> : vector<8xf32>
    %339 = vector.multi_reduction <add>, %338, %cst_73 [1] : vector<8x64xf32> to vector<8xf32>
    %340 = vector.shape_cast %339 : vector<8xf32> to vector<8x1xf32>
    %cst_74 = arith.constant 1.250000e-01 : f32
    %341 = vector.broadcast %cst_74 : f32 to vector<8x1xf32>
    %342 = arith.mulf %340, %341 : vector<8x1xf32>
    %343 = arith.maximumf %322, %327 : vector<8x1xf32>
    %344 = arith.maximumf %343, %332 : vector<8x1xf32>
    %345 = arith.maximumf %344, %337 : vector<8x1xf32>
    %346 = arith.maximumf %345, %342 : vector<8x1xf32>
    %347 = arith.subf %322, %346 : vector<8x1xf32>
    %348 = math.exp %347 : vector<8x1xf32>
    %349 = arith.subf %327, %346 : vector<8x1xf32>
    %350 = math.exp %349 : vector<8x1xf32>
    %351 = arith.subf %332, %346 : vector<8x1xf32>
    %352 = math.exp %351 : vector<8x1xf32>
    %353 = arith.subf %337, %346 : vector<8x1xf32>
    %354 = math.exp %353 : vector<8x1xf32>
    %355 = arith.subf %342, %346 : vector<8x1xf32>
    %356 = math.exp %355 : vector<8x1xf32>
    %357 = arith.addf %348, %350 : vector<8x1xf32>
    %358 = arith.addf %357, %352 : vector<8x1xf32>
    %359 = arith.addf %358, %354 : vector<8x1xf32>
    %360 = arith.addf %359, %356 : vector<8x1xf32>
    %361 = tpu.reciprocal %360 {approx = true} : vector<8x1xf32> -> vector<8x1xf32>
    %362 = arith.mulf %348, %361 : vector<8x1xf32>
    %363 = vector.broadcast %362 : vector<8x1xf32> to vector<8x128xf32>
    %364 = arith.mulf %363, %16 : vector<8x128xf32>
    %365 = arith.mulf %350, %361 : vector<8x1xf32>
    %366 = vector.broadcast %365 : vector<8x1xf32> to vector<8x128xf32>
    %367 = arith.mulf %366, %17 : vector<8x128xf32>
    %368 = arith.addf %364, %367 : vector<8x128xf32>
    %369 = arith.mulf %352, %361 : vector<8x1xf32>
    %370 = vector.broadcast %369 : vector<8x1xf32> to vector<8x128xf32>
    %371 = arith.mulf %370, %18 : vector<8x128xf32>
    %372 = arith.addf %368, %371 : vector<8x128xf32>
    %373 = arith.mulf %354, %361 : vector<8x1xf32>
    %374 = vector.broadcast %373 : vector<8x1xf32> to vector<8x128xf32>
    %375 = arith.mulf %374, %19 : vector<8x128xf32>
    %376 = arith.addf %372, %375 : vector<8x128xf32>
    %377 = arith.mulf %356, %361 : vector<8x1xf32>
    %378 = vector.broadcast %377 : vector<8x1xf32> to vector<8x128xf32>
    %379 = arith.mulf %378, %20 : vector<8x128xf32>
    %380 = arith.addf %376, %379 : vector<8x128xf32>
    %381 = vector.broadcast %29 : vector<8x1xf32> to vector<8x128xf32>
    %382 = arith.mulf %128, %381 : vector<8x128xf32>
    %383 = vector.broadcast %38 : vector<8x1xf32> to vector<8x128xf32>
    %384 = arith.mulf %191, %383 : vector<8x128xf32>
    %385 = arith.addf %382, %384 : vector<8x128xf32>
    %386 = arith.addf %29, %38 : vector<8x1xf32>
    %387 = vector.broadcast %47 : vector<8x1xf32> to vector<8x128xf32>
    %388 = arith.mulf %254, %387 : vector<8x128xf32>
    %389 = arith.addf %385, %388 : vector<8x128xf32>
    %390 = arith.addf %386, %47 : vector<8x1xf32>
    %391 = vector.broadcast %56 : vector<8x1xf32> to vector<8x128xf32>
    %392 = arith.mulf %317, %391 : vector<8x128xf32>
    %393 = arith.addf %389, %392 : vector<8x128xf32>
    %394 = arith.addf %390, %56 : vector<8x1xf32>
    %395 = vector.broadcast %65 : vector<8x1xf32> to vector<8x128xf32>
    %396 = arith.mulf %380, %395 : vector<8x128xf32>
    %397 = arith.addf %393, %396 : vector<8x128xf32>
    %398 = arith.addf %394, %65 : vector<8x1xf32>
    %cst_75 = arith.constant 9.99999993E-9 : f32
    %399 = vector.broadcast %cst_75 : f32 to vector<8x1xf32>
    %400 = arith.addf %398, %399 : vector<8x1xf32>
    %401 = tpu.reciprocal %400 {approx = true} : vector<8x1xf32> -> vector<8x1xf32>
    %402 = vector.broadcast %401 : vector<8x1xf32> to vector<8x128xf32>
    %403 = arith.mulf %397, %402 : vector<8x128xf32>
    %c0_76 = arith.constant 0 : index
    %c0_77 = arith.constant 0 : index
    %404 = vector.load %arg4[%c0_76, %c0_77] : memref<128x256xf32, #tpu.memory_space<vmem>>, vector<128x256xf32>
    %cst_78 = arith.constant dense<0.000000e+00> : vector<8x256xf32>
    %405 = tpu.matmul %403, %404, %cst_78 {dimension_numbers = #tpu.dot_dimension_numbers<[1], [0], [0], [1], [0, 0, 1, 1], [], []>} : vector<8x128xf32>, vector<128x256xf32>, vector<8x256xf32> -> vector<8x256xf32>
    %c0_79 = arith.constant 0 : index
    %c0_80 = arith.constant 0 : index
    %406 = vector.load %arg5[%c0_79, %c0_80] : memref<1x256xf32, #tpu.memory_space<vmem>>, vector<1x256xf32>
    %407 = vector.broadcast %406 : vector<1x256xf32> to vector<8x256xf32>
    %408 = arith.addf %405, %407 : vector<8x256xf32>
    %cst_81 = arith.constant 5.000000e-01 : f32
    %409 = vector.broadcast %cst_81 : f32 to vector<8x256xf32>
    %410 = arith.mulf %409, %408 : vector<8x256xf32>
    %411 = arith.mulf %408, %408 : vector<8x256xf32>
    %412 = arith.mulf %411, %408 : vector<8x256xf32>
    %cst_82 = arith.constant 4.471500e-02 : f32
    %413 = vector.broadcast %cst_82 : f32 to vector<8x256xf32>
    %414 = arith.mulf %413, %412 : vector<8x256xf32>
    %415 = arith.addf %408, %414 : vector<8x256xf32>
    %cst_83 = arith.constant 0.797884583 : f32
    %416 = vector.broadcast %cst_83 : f32 to vector<8x256xf32>
    %417 = arith.mulf %416, %415 : vector<8x256xf32>
    %418 = math.tanh %417 : vector<8x256xf32>
    %cst_84 = arith.constant 1.000000e+00 : f32
    %419 = vector.broadcast %cst_84 : f32 to vector<8x256xf32>
    %420 = arith.addf %419, %418 : vector<8x256xf32>
    %421 = arith.mulf %410, %420 : vector<8x256xf32>
    %c0_85 = arith.constant 0 : index
    %c0_86 = arith.constant 0 : index
    %422 = vector.load %arg6[%c0_85, %c0_86] : memref<256x128xf32, #tpu.memory_space<vmem>>, vector<256x128xf32>
    %cst_87 = arith.constant dense<0.000000e+00> : vector<8x128xf32>
    %423 = tpu.matmul %421, %422, %cst_87 {dimension_numbers = #tpu.dot_dimension_numbers<[1], [0], [0], [1], [0, 0, 1, 1], [], []>} : vector<8x256xf32>, vector<256x128xf32>, vector<8x128xf32> -> vector<8x128xf32>
    %c0_88 = arith.constant 0 : index
    %c0_89 = arith.constant 0 : index
    %424 = vector.load %arg7[%c0_88, %c0_89] : memref<1x128xf32, #tpu.memory_space<vmem>>, vector<1x128xf32>
    %425 = vector.broadcast %424 : vector<1x128xf32> to vector<8x128xf32>
    %426 = arith.addf %423, %425 : vector<8x128xf32>
    %c0_90 = arith.constant 0 : index
    %c0_91 = arith.constant 0 : index
    %427 = vector.load %arg8[%c0_90, %c0_91] : memref<8x128xf32, #tpu.memory_space<vmem>>, vector<8x128xf32>
    tpu.vector_store %arg8[%c0_90, %c0_91], %426 {strides = array<i32>} : memref<8x128xf32, #tpu.memory_space<vmem>>, vector<8x128xf32>,
    return
  }
  func.func @transform_0(%arg0: i32) -> (i32, i32) {
    %c0_i32 = arith.constant 0 : i32
    %c0_i32_0 = arith.constant 0 : i32
    return %arg0, %c0_i32 : i32, i32
  }
  func.func @transform_1(%arg0: i32) -> (i32, i32) {
    %c0_i32 = arith.constant 0 : i32
    %c0_i32_0 = arith.constant 0 : i32
    %c0_i32_1 = arith.constant 0 : i32
    return %c0_i32, %c0_i32_0 : i32, i32
  }
  func.func @transform_2(%arg0: i32) -> (i32, i32) {
    %c0_i32 = arith.constant 0 : i32
    %c0_i32_0 = arith.constant 0 : i32
    %c0_i32_1 = arith.constant 0 : i32
    return %c0_i32, %c0_i32_0 : i32, i32
  }
  func.func @transform_3(%arg0: i32) -> (i32, i32) {
    %c0_i32 = arith.constant 0 : i32
    %c0_i32_0 = arith.constant 0 : i32
    %c0_i32_1 = arith.constant 0 : i32
    return %c0_i32, %c0_i32_0 : i32, i32
  }
  func.func @transform_4(%arg0: i32) -> (i32, i32) {
    %c0_i32 = arith.constant 0 : i32
    %c0_i32_0 = arith.constant 0 : i32
    %c0_i32_1 = arith.constant 0 : i32
    return %c0_i32, %c0_i32_0 : i32, i32
  }
  func.func @transform_5(%arg0: i32) -> (i32, i32) {
    %c0_i32 = arith.constant 0 : i32
    %c0_i32_0 = arith.constant 0 : i32
    %c0_i32_1 = arith.constant 0 : i32
    return %c0_i32, %c0_i32_0 : i32, i32
  }
  func.func @transform_6(%arg0: i32) -> (i32, i32) {
    %c0_i32 = arith.constant 0 : i32
    %c0_i32_0 = arith.constant 0 : i32
    %c0_i32_1 = arith.constant 0 : i32
    return %c0_i32, %c0_i32_0 : i32, i32
  }
  func.func @transform_7(%arg0: i32) -> (i32, i32) {
    %c0_i32 = arith.constant 0 : i32
    %c0_i32_0 = arith.constant 0 : i32
    return %arg0, %c0_i32 : i32, i32
  }
}

</mosaic_0001>

<llo_original>
// kernel: tpu_custom_call.1
$region0: #{tpu_custom_call.1}
  #allocation0 [shape = 'u32[]', space=smem, size = 0x4, offset = 0x4, fixed_abs, tag = 'smem constant byte address 0x4 - core index']
  #allocation1 [shape = 'u32[144,128]{1,0:T(1,128)}', space=vmem, size = 0x12000, scoped, tag = 'internal scratch']
  %s0 = inlined_call_operand.hbm [shape: f32[8,40], index: 0, kind: input, shape index: {}]
  %s1 = inlined_call_operand.hbm [shape: f32[40,1280], index: 1, kind: input, shape index: {}]
  %s2 = inlined_call_operand.hbm [shape: f32[1,1280], index: 2, kind: input, shape index: {}]
  %s3 = inlined_call_operand.hbm [shape: f32[128,256], index: 3, kind: input, shape index: {}]
  %s4 = inlined_call_operand.vmem [shape: f32[1,256], index: 4, kind: input, shape index: {}]
  %s5 = inlined_call_operand.hbm [shape: f32[256,128], index: 5, kind: input, shape index: {}]
  %s6 = inlined_call_operand.vmem [shape: f32[1,128], index: 6, kind: input, shape index: {}]
  %s7 = inlined_call_operand.hbm [shape: f32[8,128], index: 7, kind: output, shape index: {}]
  %s8 = sld [smem:[#allocation0]]
  $region58: #{tpu_custom_call.1} parent=0
    _
  %s10 = ssub.s32 1, %s8
  %s11 = scalar_select 0, %s10, %s8
  $region1: #{tpu_custom_call.1} parent=0
    #allocation2 [shape = 'u8[4096]{0}', space=vmem, size = 0x1000, scoped, tag = 'input window, operand 0, single buffered']
    #allocation3 [shape = 's32[1]{0}', space=sflag, size = 0x4, scoped, tag = 'scoped memory for tpu_custom_call.1']
    #allocation4 [shape = 's32[1]{0}', space=sflag, size = 0x4, scoped, tag = 'scoped memory for tpu_custom_call.1']
    #allocation5 [shape = 'u8[204800]{0}', space=vmem, size = 0x32000, scoped, tag = 'input window, operand 1, single buffered']
    #allocation6 [shape = 's32[1]{0}', space=sflag, size = 0x4, scoped, tag = 'scoped memory for tpu_custom_call.1']
    #allocation7 [shape = 'u8[5120]{0}', space=vmem, size = 0x1400, scoped, tag = 'input window, operand 2, single buffered']
    #allocation8 [shape = 'u8[131072]{0}', space=vmem, size = 0x20000, scoped, tag = 'input window, operand 3, single buffered']
    #allocation9 [shape = 's32[1]{0}', space=sflag, size = 0x4, scoped, tag = 'scoped memory for tpu_custom_call.1']
    #allocation10 [shape = 'u8[131072]{0}', space=vmem, size = 0x20000, scoped, tag = 'input window, operand 5, single buffered']
    #allocation11 [shape = 'u8[4096]{0}', space=vmem, size = 0x1000, scoped, tag = 'output window, operand 0, single buffered']
    %12 = vsyncpa [#allocation3], 0
    %13 = vsyncpa [#allocation6], 0
    %14 = vsyncpa [#allocation9], 0
    %15 = vsyncpa [#allocation4], 0
    // Predicated region
    $region2: #{tpu_custom_call.1} parent=1 // pred_check
      _
    $region3: #{tpu_custom_call.1} parent=1 // pred_check_branch
      %17 = sbr.rel (0) target = $region5
    $region4: #{tpu_custom_call.1} parent=1 // pred_region
      %s19 = ssub.s32 128, 128
      %20 = vsyncadd [#allocation3], %s19
      %s22 = sshll.u32 [#allocation2], 4
      %s23 = int_to_ptr.vmem [resolvable:$true] %s22
      %25 = dma.hbm_to_vmem [thread:$0]  %s0, 128, %s23, [#allocation3]
    $region5: #{tpu_custom_call.1} parent=1 // pred_fallthru
      _
    // Predicated region
    $region6: #{tpu_custom_call.1} parent=1 // pred_check
      _
    $region7: #{tpu_custom_call.1} parent=1 // pred_check_branch
      %27 = sbr.rel (0) target = $region9
    $region8: #{tpu_custom_call.1} parent=1 // pred_region
      %s29 = ssub.s32 6400, 6400
      %30 = vsyncadd [#allocation6], %s29
      %s31 = sshll.u32 [#allocation5], 4
      %s32 = int_to_ptr.vmem [resolvable:$true] %s31
      %37 = dma.hbm_to_vmem [thread:$0]  %s1, 6400, %s32, [#allocation6], 1280, 1280, 80
    $region9: #{tpu_custom_call.1} parent=1 // pred_fallthru
      _
    // Predicated region
    $region10: #{tpu_custom_call.1} parent=1 // pred_check
      _
    $region11: #{tpu_custom_call.1} parent=1 // pred_check_branch
      %39 = sbr.rel (0) target = $region13
    $region12: #{tpu_custom_call.1} parent=1 // pred_region
      %s41 = ssub.s32 160, 160
      %42 = vsyncadd [#allocation6], %s41
      %s44 = sshll.u32 [#allocation7], 4
      %s45 = int_to_ptr.vmem [resolvable:$true] %s44
      %47 = dma.hbm_to_vmem [thread:$0]  %s2, 160, %s45, [#allocation6]
    $region13: #{tpu_custom_call.1} parent=1 // pred_fallthru
      _
    // Predicated region
    $region14: #{tpu_custom_call.1} parent=1 // pred_check
      _
    $region15: #{tpu_custom_call.1} parent=1 // pred_check_branch
      %49 = sbr.rel (0) target = $region17
    $region16: #{tpu_custom_call.1} parent=1 // pred_region
      %s51 = ssub.s32 4096, 4096
      %52 = vsyncadd [#allocation9], %s51
      %s53 = sshll.u32 [#allocation8], 4
      %s54 = int_to_ptr.vmem [resolvable:$true] %s53
      %59 = dma.hbm_to_vmem [thread:$0]  %s3, 4096, %s54, [#allocation9], 256, 256, 16
    $region17: #{tpu_custom_call.1} parent=1 // pred_fallthru
      _
    // Predicated region
    $region18: #{tpu_custom_call.1} parent=1 // pred_check
      _
    $region19: #{tpu_custom_call.1} parent=1 // pred_check_branch
      %61 = sbr.rel (0) target = $region21
    $region20: #{tpu_custom_call.1} parent=1 // pred_region
      _
    $region21: #{tpu_custom_call.1} parent=1 // pred_fallthru
      _
    // Predicated region
    $region22: #{tpu_custom_call.1} parent=1 // pred_check
      _
    $region23: #{tpu_custom_call.1} parent=1 // pred_check_branch
      %63 = sbr.rel (0) target = $region25
    $region24: #{tpu_custom_call.1} parent=1 // pred_region
      %s65 = ssub.s32 4096, 4096
      %66 = vsyncadd [#allocation9], %s65
      %s67 = sshll.u32 [#allocation10], 4
      %s68 = int_to_ptr.vmem [resolvable:$true] %s67
      %73 = dma.hbm_to_vmem [thread:$0]  %s5, 4096, %s68, [#allocation9], 128, 128, 8
    $region25: #{tpu_custom_call.1} parent=1 // pred_fallthru
      _
    // Predicated region
    $region26: #{tpu_custom_call.1} parent=1 // pred_check
      _
    $region27: #{tpu_custom_call.1} parent=1 // pred_check_branch
      %75 = sbr.rel (0) target = $region29
    $region28: #{tpu_custom_call.1} parent=1 // pred_region
      _
    $region29: #{tpu_custom_call.1} parent=1 // pred_fallthru
      _
    // Predicated region
    $region30: #{tpu_custom_call.1} parent=1 // pred_check
      _
    $region31: #{tpu_custom_call.1} parent=1 // pred_check_branch
      %77 = sbr.rel (0) target = $region33
    $region32: #{tpu_custom_call.1} parent=1 // pred_region
      %78 = dma.done [#allocation3], 128
    $region33: #{tpu_custom_call.1} parent=1 // pred_fallthru
      _
    // Predicated region
    $region34: #{tpu_custom_call.1} parent=1 // pred_check
      _
    $region35: #{tpu_custom_call.1} parent=1 // pred_check_branch
      %80 = sbr.rel (0) target = $region37
    $region36: #{tpu_custom_call.1} parent=1 // pred_region
      %81 = dma.done [#allocation6], 6400
    $region37: #{tpu_custom_call.1} parent=1 // pred_fallthru
      _
    // Predicated region
    $region38: #{tpu_custom_call.1} parent=1 // pred_check
      _
    $region39: #{tpu_custom_call.1} parent=1 // pred_check_branch
      %83 = sbr.rel (0) target = $region41
    $region40: #{tpu_custom_call.1} parent=1 // pred_region
      %84 = dma.done [#allocation6], 160
    $region41: #{tpu_custom_call.1} parent=1 // pred_fallthru
      _
    // Predicated region
    $region42: #{tpu_custom_call.1} parent=1 // pred_check
      _
    $region43: #{tpu_custom_call.1} parent=1 // pred_check_branch
      %86 = sbr.rel (0) target = $region45
    $region44: #{tpu_custom_call.1} parent=1 // pred_region
      %87 = dma.done [#allocation9], 4096
    $region45: #{tpu_custom_call.1} parent=1 // pred_fallthru
      _
    // Predicated region
    $region46: #{tpu_custom_call.1} parent=1 // pred_check
      _
    $region47: #{tpu_custom_call.1} parent=1 // pred_check_branch
      %89 = sbr.rel (0) target = $region49
    $region48: #{tpu_custom_call.1} parent=1 // pred_region
      %90 = dma.done [#allocation9], 4096
    $region49: #{tpu_custom_call.1} parent=1 // pred_fallthru
      _
    %v91 = vld [vmem:[#allocation2] sm:$0xff]
    %v92 = vld [vmem:[#allocation5] sm:$0xff]
    %v93 = vld [vmem:[#allocation5 + $0x8] sm:$0xff]
    %v94 = vld [vmem:[#allocation5 + $0x10] sm:$0xff]
    %v95 = vld [vmem:[#allocation5 + $0x18] sm:$0xff]
    %v96 = vld [vmem:[#allocation5 + $0x20] sm:$0xff]
    %v97 = vld [vmem:[#allocation5 + $0x28] sm:$0xff]
    %v98 = vld [vmem:[#allocation5 + $0x30] sm:$0xff]
    %v99 = vld [vmem:[#allocation5 + $0x38] sm:$0xff]
    %v100 = vld [vmem:[#allocation5 + $0x40] sm:$0xff]
    %v101 = vld [vmem:[#allocation5 + $0x48] sm:$0xff]
    %v102 = vld [vmem:[#allocation5 + $0x50] sm:$0xff]
    %v103 = vld [vmem:[#allocation5 + $0x58] sm:$0xff]
    %v104 = vld [vmem:[#allocation5 + $0x60] sm:$0xff]
    %v105 = vld [vmem:[#allocation5 + $0x68] sm:$0xff]
    %v106 = vld [vmem:[#allocation5 + $0x70] sm:$0xff]
    %v107 = vld [vmem:[#allocation5 + $0x78] sm:$0xff]
    %v108 = vld [vmem:[#allocation5 + $0x80] sm:$0xff]
    %v109 = vld [vmem:[#allocation5 + $0x88] sm:$0xff]
    %v110 = vld [vmem:[#allocation5 + $0x90] sm:$0xff]
    %v111 = vld [vmem:[#allocation5 + $0x98] sm:$0xff]
    %v112 = vld [vmem:[#allocation5 + $0xa0] sm:$0xff]
    %v113 = vld [vmem:[#allocation5 + $0xa8] sm:$0xff]
    %v114 = vld [vmem:[#allocation5 + $0xb0] sm:$0xff]
    %v115 = vld [vmem:[#allocation5 + $0xb8] sm:$0xff]
    %v116 = vld [vmem:[#allocation5 + $0xc0] sm:$0xff]
    %v117 = vld [vmem:[#allocation5 + $0xc8] sm:$0xff]
    %v118 = vld [vmem:[#allocation5 + $0xd0] sm:$0xff]
    %v119 = vld [vmem:[#allocation5 + $0xd8] sm:$0xff]
    %v120 = vld [vmem:[#allocation5 + $0xe0] sm:$0xff]
    %v121 = vld [vmem:[#allocation5 + $0xe8] sm:$0xff]
    %v122 = vld [vmem:[#allocation5 + $0xf0] sm:$0xff]
    %v123 = vld [vmem:[#allocation5 + $0xf8] sm:$0xff]
    %v124 = vld [vmem:[#allocation5 + $0x100] sm:$0xff]
    %v125 = vld [vmem:[#allocation5 + $0x108] sm:$0xff]
    %v126 = vld [vmem:[#allocation5 + $0x110] sm:$0xff]
    %v127 = vld [vmem:[#allocation5 + $0x118] sm:$0xff]
    %v128 = vld [vmem:[#allocation5 + $0x120] sm:$0xff]
    %v129 = vld [vmem:[#allocation5 + $0x128] sm:$0xff]
    %v130 = vld [vmem:[#allocation5 + $0x130] sm:$0xff]
    %v131 = vld [vmem:[#allocation5 + $0x138] sm:$0xff]
    %v132 = vld [vmem:[#allocation5 + $0x140] sm:$0xff]
    %v133 = vld [vmem:[#allocation5 + $0x148] sm:$0xff]
    %v134 = vld [vmem:[#allocation5 + $0x150] sm:$0xff]
    %v135 = vld [vmem:[#allocation5 + $0x158] sm:$0xff]
    %v136 = vld [vmem:[#allocation5 + $0x160] sm:$0xff]
    %v137 = vld [vmem:[#allocation5 + $0x168] sm:$0xff]
    %v138 = vld [vmem:[#allocation5 + $0x170] sm:$0xff]
    %v139 = vld [vmem:[#allocation5 + $0x178] sm:$0xff]
    %v140 = vld [vmem:[#allocation5 + $0x180] sm:$0xff]
    %v141 = vld [vmem:[#allocation5 + $0x188] sm:$0xff]
    %v142 = vld [vmem:[#allocation7] sm:$0xff]
    %v143 = vld [vmem:[#allocation7 + $0x8] sm:$0x3]
    %v146 = vlaneseq
    %v147 = vshrl.u32 %v146, 7
    %v148 = vsub.s32 0, %v147
    %v149 = vrot.slane %v142, %v148
    %v150 = vlaneseq
    %v151 = vshrl.u32 %v150, 7
    %v152 = vsub.s32 1, %v151
    %v153 = vrot.slane %v142, %v152
    %v154 = vlaneseq
    %v155 = vshrl.u32 %v154, 7
    %v156 = vsub.s32 2, %v155
    %v157 = vrot.slane %v142, %v156
    %v158 = vlaneseq
    %v159 = vshrl.u32 %v158, 7
    %v160 = vsub.s32 3, %v159
    %v161 = vrot.slane %v142, %v160
    %v162 = vlaneseq
    %v163 = vshrl.u32 %v162, 7
    %v164 = vsub.s32 4, %v163
    %v165 = vrot.slane %v142, %v164
    %v166 = vlaneseq
    %v167 = vshrl.u32 %v166, 7
    %v168 = vsub.s32 5, %v167
    %v169 = vrot.slane %v142, %v168
    %v170 = vlaneseq
    %v171 = vshrl.u32 %v170, 7
    %v172 = vsub.s32 6, %v171
    %v173 = vrot.slane %v142, %v172
    %v174 = vlaneseq
    %v175 = vshrl.u32 %v174, 7
    %v176 = vsub.s32 7, %v175
    %v177 = vrot.slane %v142, %v176
    %v178 = vlaneseq
    %v179 = vshrl.u32 %v178, 7
    %v180 = vsub.s32 0, %v179
    %v181 = vrot.slane %v143, %v180
    %v182 = vlaneseq
    %v183 = vshrl.u32 %v182, 7
    %v184 = vsub.s32 1, %v183
    %v185 = vrot.slane %v143, %v184
    %vm196 = vcmask 326656
    %v198 = vsel %vm196, %v91, 0
    %200 = vmatprep.subr.mxu0 %v93
    %201 = vmatpush1.msra.mxu0 %v92
    %202 = vmatprep.subr.mxu0 %v103
    %203 = vmatpush1.msra.mxu0 %v102
    %204 = vmatprep.subr.mxu0 %v113
    %205 = vmatpush1.msra.mxu0 %v112
    %206 = vmatprep.subr.mxu0 %v123
    %207 = vmatpush1.msra.mxu0 %v122
    %208 = vmatprep.subr.mxu0 %v133
    %209 = vmatpush1.msra.mxu0 %v132
    %210 = vmatprep.subr.mxu0 0.0
    %211 = vmatpush1.msra.mxu0 0.0
    %212 = vmatprep.subr.mxu0 0.0
    %213 = vmatpush1.msra.mxu0 0.0
    %214 = vmatprep.subr.mxu0 0.0
    %215 = vmatpush1.msra.mxu0 0.0
    %216 = vmatprep.subr.mxu0 0.0
    %217 = vmatpush1.msra.mxu0 0.0
    %218 = vmatprep.subr.mxu0 0.0
    %219 = vmatpush1.msra.mxu0 0.0
    %220 = vmatprep.subr.mxu0 0.0
    %221 = vmatpush1.msra.mxu0 0.0
    %222 = vmatprep.subr.mxu0 0.0
    %223 = vmatpush1.msra.mxu0 0.0
    %224 = vmatprep.subr.mxu0 0.0
    %225 = vmatpush1.msra.mxu0 0.0
    %226 = vmatprep.subr.mxu0 0.0
    %227 = vmatpush1.msra.mxu0 0.0
    %228 = vmatprep.subr.mxu0 0.0
    %229 = vmatpush1.msra.mxu0 0.0
    %230 = vmatprep.subr.mxu0 0.0
    %231 = vmatpush1.msra.mxu0 0.0
    %232 = vmatprep.subr.mxu0 0.0
    %233 = vmatpush1.msra.mxu0 0.0
    %234 = vmatprep.subr.mxu0 0.0
    %235 = vmatpush1.msra.mxu0 0.0
    %236 = vmatprep.subr.mxu0 0.0
    %237 = vmatpush1.msra.mxu0 0.0
    %238 = vmatprep.subr.mxu0 0.0
    %239 = vmatpush1.msra.mxu0 0.0
    %240 = vmatprep.subr.mxu0 0.0
    %241 = vmatpush1.msra.mxu0 0.0
    %242 = vmatprep.subr.mxu0 0.0
    %243 = vmatpush1.msra.mxu0 0.0
    %244 = vmatprep.subr.mxu0 0.0
    %245 = vmatpush1.msra.mxu0 0.0
    %246 = vmatprep.subr.mxu0 0.0
    %247 = vmatpush1.msra.mxu0 0.0
    %248 = vmatprep.subr.mxu0 0.0
    %249 = vmatpush1.msra.mxu0 0.0
    %250 = vmatprep.subr.mxu0 0.0
    %251 = vmatpush1.msra.mxu0 0.0
    %252 = vmatprep.subr.mxu0 0.0
    %253 = vmatpush1.msra.mxu0 0.0
    %254 = vmatprep.subr.mxu0 0.0
    %255 = vmatpush1.msra.mxu0 0.0
    %256 = vmatprep.subr.mxu0 0.0
    %257 = vmatpush1.msra.mxu0 0.0
    %258 = vmatprep.subr.mxu0 0.0
    %259 = vmatpush1.msra.mxu0 0.0
    %260 = vmatprep.subr.mxu0 0.0
    %261 = vmatpush1.msra.mxu0 0.0
    %262 = vmatprep.subr.mxu0 0.0
    %263 = vmatpush1.msra.mxu0 0.0
    %264 = vmatprep.mubr.f32.mxu0 0.0
    %265 = vmatmul.mubr.f32.gmra.mrb[0].mxu0 %v198
    %v266 = vpop.f32.mrb[0].mxu0
    %v267 = vadd.f32 %v149, %v266
    %v268 = vpop.f32.mrb[0].mxu0
    %v269 = vadd.f32 %v153, %v268
    %270 = vdwg.mxu0
    %271 = vmatprep.subr.mxu0 %v95
    %272 = vmatpush1.msra.mxu0 %v94
    %273 = vmatprep.subr.mxu0 %v105
    %274 = vmatpush1.msra.mxu0 %v104
    %275 = vmatprep.subr.mxu0 %v115
    %276 = vmatpush1.msra.mxu0 %v114
    %277 = vmatprep.subr.mxu0 %v125
    %278 = vmatpush1.msra.mxu0 %v124
    %279 = vmatprep.subr.mxu0 %v135
    %280 = vmatpush1.msra.mxu0 %v134
    %281 = vmatprep.subr.mxu0 0.0
    %282 = vmatpush1.msra.mxu0 0.0
    %283 = vmatprep.subr.mxu0 0.0
    %284 = vmatpush1.msra.mxu0 0.0
    %285 = vmatprep.subr.mxu0 0.0
    %286 = vmatpush1.msra.mxu0 0.0
    %287 = vmatprep.subr.mxu0 0.0
    %288 = vmatpush1.msra.mxu0 0.0
    %289 = vmatprep.subr.mxu0 0.0
    %290 = vmatpush1.msra.mxu0 0.0
    %291 = vmatprep.subr.mxu0 0.0
    %292 = vmatpush1.msra.mxu0 0.0
    %293 = vmatprep.subr.mxu0 0.0
    %294 = vmatpush1.msra.mxu0 0.0
    %295 = vmatprep.subr.mxu0 0.0
    %296 = vmatpush1.msra.mxu0 0.0
    %297 = vmatprep.subr.mxu0 0.0
    %298 = vmatpush1.msra.mxu0 0.0
    %299 = vmatprep.subr.mxu0 0.0
    %300 = vmatpush1.msra.mxu0 0.0
    %301 = vmatprep.subr.mxu0 0.0
    %302 = vmatpush1.msra.mxu0 0.0
    %303 = vmatprep.subr.mxu0 0.0
    %304 = vmatpush1.msra.mxu0 0.0
    %305 = vmatprep.subr.mxu0 0.0
    %306 = vmatpush1.msra.mxu0 0.0
    %307 = vmatprep.subr.mxu0 0.0
    %308 = vmatpush1.msra.mxu0 0.0
    %309 = vmatprep.subr.mxu0 0.0
    %310 = vmatpush1.msra.mxu0 0.0
    %311 = vmatprep.subr.mxu0 0.0
    %312 = vmatpush1.msra.mxu0 0.0
    %313 = vmatprep.subr.mxu0 0.0
    %314 = vmatpush1.msra.mxu0 0.0
    %315 = vmatprep.subr.mxu0 0.0
    %316 = vmatpush1.msra.mxu0 0.0
    %317 = vmatprep.subr.mxu0 0.0
    %318 = vmatpush1.msra.mxu0 0.0
    %319 = vmatprep.subr.mxu0 0.0
    %320 = vmatpush1.msra.mxu0 0.0
    %321 = vmatprep.subr.mxu0 0.0
    %322 = vmatpush1.msra.mxu0 0.0
    %323 = vmatprep.subr.mxu0 0.0
    %324 = vmatpush1.msra.mxu0 0.0
    %325 = vmatprep.subr.mxu0 0.0
    %326 = vmatpush1.msra.mxu0 0.0
    %327 = vmatprep.subr.mxu0 0.0
    %328 = vmatpush1.msra.mxu0 0.0
    %329 = vmatprep.subr.mxu0 0.0
    %330 = vmatpush1.msra.mxu0 0.0
    %331 = vmatprep.subr.mxu0 0.0
    %332 = vmatpush1.msra.mxu0 0.0
    %333 = vmatprep.subr.mxu0 0.0
    %334 = vmatpush1.msra.mxu0 0.0
    %335 = vmatprep.mubr.f32.mxu0 0.0
    %336 = vmatmul.mubr.f32.gmra.mrb[0].mxu0 %v198
    %v337 = vpop.f32.mrb[0].mxu0
    %v338 = vadd.f32 %v157, %v337
    %v339 = vpop.f32.mrb[0].mxu0
    %v340 = vadd.f32 %v161, %v339
    %341 = vdwg.mxu0
    %342 = vmatprep.subr.mxu0 %v97
    %343 = vmatpush1.msra.mxu0 %v96
    %344 = vmatprep.subr.mxu0 %v107
    %345 = vmatpush1.msra.mxu0 %v106
    %346 = vmatprep.subr.mxu0 %v117
    %347 = vmatpush1.msra.mxu0 %v116
    %348 = vmatprep.subr.mxu0 %v127
    %349 = vmatpush1.msra.mxu0 %v126
    %350 = vmatprep.subr.mxu0 %v137
    %351 = vmatpush1.msra.mxu0 %v136
    %352 = vmatprep.subr.mxu0 0.0
    %353 = vmatpush1.msra.mxu0 0.0
    %354 = vmatprep.subr.mxu0 0.0
    %355 = vmatpush1.msra.mxu0 0.0
    %356 = vmatprep.subr.mxu0 0.0
    %357 = vmatpush1.msra.mxu0 0.0
    %358 = vmatprep.subr.mxu0 0.0
    %359 = vmatpush1.msra.mxu0 0.0
    %360 = vmatprep.subr.mxu0 0.0
    %361 = vmatpush1.msra.mxu0 0.0
    %362 = vmatprep.subr.mxu0 0.0
    %363 = vmatpush1.msra.mxu0 0.0
    %364 = vmatprep.subr.mxu0 0.0
    %365 = vmatpush1.msra.mxu0 0.0
    %366 = vmatprep.subr.mxu0 0.0
    %367 = vmatpush1.msra.mxu0 0.0
    %368 = vmatprep.subr.mxu0 0.0
    %369 = vmatpush1.msra.mxu0 0.0
    %370 = vmatprep.subr.mxu0 0.0
    %371 = vmatpush1.msra.mxu0 0.0
    %372 = vmatprep.subr.mxu0 0.0
    %373 = vmatpush1.msra.mxu0 0.0
    %374 = vmatprep.subr.mxu0 0.0
    %375 = vmatpush1.msra.mxu0 0.0
    %376 = vmatprep.subr.mxu0 0.0
    %377 = vmatpush1.msra.mxu0 0.0
    %378 = vmatprep.subr.mxu0 0.0
    %379 = vmatpush1.msra.mxu0 0.0
    %380 = vmatprep.subr.mxu0 0.0
    %381 = vmatpush1.msra.mxu0 0.0
    %382 = vmatprep.subr.mxu0 0.0
    %383 = vmatpush1.msra.mxu0 0.0
    %384 = vmatprep.subr.mxu0 0.0
    %385 = vmatpush1.msra.mxu0 0.0
    %386 = vmatprep.subr.mxu0 0.0
    %387 = vmatpush1.msra.mxu0 0.0
    %388 = vmatprep.subr.mxu0 0.0
    %389 = vmatpush1.msra.mxu0 0.0
    %390 = vmatprep.subr.mxu0 0.0
    %391 = vmatpush1.msra.mxu0 0.0
    %392 = vmatprep.subr.mxu0 0.0
    %393 = vmatpush1.msra.mxu0 0.0
    %394 = vmatprep.subr.mxu0 0.0
    %395 = vmatpush1.msra.mxu0 0.0
    %396 = vmatprep.subr.mxu0 0.0
    %397 = vmatpush1.msra.mxu0 0.0
    %398 = vmatprep.subr.mxu0 0.0
    %399 = vmatpush1.msra.mxu0 0.0
    %400 = vmatprep.subr.mxu0 0.0
    %401 = vmatpush1.msra.mxu0 0.0
    %402 = vmatprep.subr.mxu0 0.0
    %403 = vmatpush1.msra.mxu0 0.0
    %404 = vmatprep.subr.mxu0 0.0
    %405 = vmatpush1.msra.mxu0 0.0
    %406 = vmatprep.mubr.f32.mxu0 0.0
    %407 = vmatmul.mubr.f32.gmra.mrb[0].mxu0 %v198
    %v408 = vpop.f32.mrb[0].mxu0
    %v409 = vadd.f32 %v165, %v408
    %v410 = vpop.f32.mrb[0].mxu0
    %v411 = vadd.f32 %v169, %v410
    %412 = vdwg.mxu0
    %413 = vmatprep.subr.mxu0 %v99
    %414 = vmatpush1.msra.mxu0 %v98
    %415 = vmatprep.subr.mxu0 %v109
    %416 = vmatpush1.msra.mxu0 %v108
    %417 = vmatprep.subr.mxu0 %v119
    %418 = vmatpush1.msra.mxu0 %v118
    %419 = vmatprep.subr.mxu0 %v129
    %420 = vmatpush1.msra.mxu0 %v128
    %421 = vmatprep.subr.mxu0 %v139
    %422 = vmatpush1.msra.mxu0 %v138
    %423 = vmatprep.subr.mxu0 0.0
    %424 = vmatpush1.msra.mxu0 0.0
    %425 = vmatprep.subr.mxu0 0.0
    %426 = vmatpush1.msra.mxu0 0.0
    %427 = vmatprep.subr.mxu0 0.0
    %428 = vmatpush1.msra.mxu0 0.0
    %429 = vmatprep.subr.mxu0 0.0
    %430 = vmatpush1.msra.mxu0 0.0
    %431 = vmatprep.subr.mxu0 0.0
    %432 = vmatpush1.msra.mxu0 0.0
    %433 = vmatprep.subr.mxu0 0.0
    %434 = vmatpush1.msra.mxu0 0.0
    %435 = vmatprep.subr.mxu0 0.0
    %436 = vmatpush1.msra.mxu0 0.0
    %437 = vmatprep.subr.mxu0 0.0
    %438 = vmatpush1.msra.mxu0 0.0
    %439 = vmatprep.subr.mxu0 0.0
    %440 = vmatpush1.msra.mxu0 0.0
    %441 = vmatprep.subr.mxu0 0.0
    %442 = vmatpush1.msra.mxu0 0.0
    %443 = vmatprep.subr.mxu0 0.0
    %444 = vmatpush1.msra.mxu0 0.0
    %445 = vmatprep.subr.mxu0 0.0
    %446 = vmatpush1.msra.mxu0 0.0
    %447 = vmatprep.subr.mxu0 0.0
    %448 = vmatpush1.msra.mxu0 0.0
    %449 = vmatprep.subr.mxu0 0.0
    %450 = vmatpush1.msra.mxu0 0.0
    %451 = vmatprep.subr.mxu0 0.0
    %452 = vmatpush1.msra.mxu0 0.0
    %453 = vmatprep.subr.mxu0 0.0
    %454 = vmatpush1.msra.mxu0 0.0
    %455 = vmatprep.subr.mxu0 0.0
    %456 = vmatpush1.msra.mxu0 0.0
    %457 = vmatprep.subr.mxu0 0.0
    %458 = vmatpush1.msra.mxu0 0.0
    %459 = vmatprep.subr.mxu0 0.0
    %460 = vmatpush1.msra.mxu0 0.0
    %461 = vmatprep.subr.mxu0 0.0
    %462 = vmatpush1.msra.mxu0 0.0
    %463 = vmatprep.subr.mxu0 0.0
    %464 = vmatpush1.msra.mxu0 0.0
    %465 = vmatprep.subr.mxu0 0.0
    %466 = vmatpush1.msra.mxu0 0.0
    %467 = vmatprep.subr.mxu0 0.0
    %468 = vmatpush1.msra.mxu0 0.0
    %469 = vmatprep.subr.mxu0 0.0
    %470 = vmatpush1.msra.mxu0 0.0
    %471 = vmatprep.subr.mxu0 0.0
    %472 = vmatpush1.msra.mxu0 0.0
    %473 = vmatprep.subr.mxu0 0.0
    %474 = vmatpush1.msra.mxu0 0.0
    %475 = vmatprep.subr.mxu0 0.0
    %476 = vmatpush1.msra.mxu0 0.0
    %477 = vmatprep.mubr.f32.mxu0 0.0
    %478 = vmatmul.mubr.f32.gmra.mrb[0].mxu0 %v198
    %v479 = vpop.f32.mrb[0].mxu0
    %v480 = vadd.f32 %v173, %v479
    %v481 = vpop.f32.mrb[0].mxu0
    %v482 = vadd.f32 %v177, %v481
    %483 = vdwg.mxu0
    %484 = vmatprep.subr.mxu0 %v101
    %485 = vmatpush1.msra.mxu0 %v100
    %486 = vmatprep.subr.mxu0 %v111
    %487 = vmatpush1.msra.mxu0 %v110
    %488 = vmatprep.subr.mxu0 %v121
    %489 = vmatpush1.msra.mxu0 %v120
    %490 = vmatprep.subr.mxu0 %v131
    %491 = vmatpush1.msra.mxu0 %v130
    %492 = vmatprep.subr.mxu0 %v141
    %493 = vmatpush1.msra.mxu0 %v140
    %494 = vmatprep.subr.mxu0 0.0
    %495 = vmatpush1.msra.mxu0 0.0
    %496 = vmatprep.subr.mxu0 0.0
    %497 = vmatpush1.msra.mxu0 0.0
    %498 = vmatprep.subr.mxu0 0.0
    %499 = vmatpush1.msra.mxu0 0.0
    %500 = vmatprep.subr.mxu0 0.0
    %501 = vmatpush1.msra.mxu0 0.0
    %502 = vmatprep.subr.mxu0 0.0
    %503 = vmatpush1.msra.mxu0 0.0
    %504 = vmatprep.subr.mxu0 0.0
    %505 = vmatpush1.msra.mxu0 0.0
    %506 = vmatprep.subr.mxu0 0.0
    %507 = vmatpush1.msra.mxu0 0.0
    %508 = vmatprep.subr.mxu0 0.0
    %509 = vmatpush1.msra.mxu0 0.0
    %510 = vmatprep.subr.mxu0 0.0
    %511 = vmatpush1.msra.mxu0 0.0
    %512 = vmatprep.subr.mxu0 0.0
    %513 = vmatpush1.msra.mxu0 0.0
    %514 = vmatprep.subr.mxu0 0.0
    %515 = vmatpush1.msra.mxu0 0.0
    %516 = vmatprep.subr.mxu0 0.0
    %517 = vmatpush1.msra.mxu0 0.0
    %518 = vmatprep.subr.mxu0 0.0
    %519 = vmatpush1.msra.mxu0 0.0
    %520 = vmatprep.subr.mxu0 0.0
    %521 = vmatpush1.msra.mxu0 0.0
    %522 = vmatprep.subr.mxu0 0.0
    %523 = vmatpush1.msra.mxu0 0.0
    %524 = vmatprep.subr.mxu0 0.0
    %525 = vmatpush1.msra.mxu0 0.0
    %526 = vmatprep.subr.mxu0 0.0
    %527 = vmatpush1.msra.mxu0 0.0
    %528 = vmatprep.subr.mxu0 0.0
    %529 = vmatpush1.msra.mxu0 0.0
    %530 = vmatprep.subr.mxu0 0.0
    %531 = vmatpush1.msra.mxu0 0.0
    %532 = vmatprep.subr.mxu0 0.0
    %533 = vmatpush1.msra.mxu0 0.0
    %534 = vmatprep.subr.mxu0 0.0
    %535 = vmatpush1.msra.mxu0 0.0
    %536 = vmatprep.subr.mxu0 0.0
    %537 = vmatpush1.msra.mxu0 0.0
    %538 = vmatprep.subr.mxu0 0.0
    %539 = vmatpush1.msra.mxu0 0.0
    %540 = vmatprep.subr.mxu0 0.0
    %541 = vmatpush1.msra.mxu0 0.0
    %542 = vmatprep.subr.mxu0 0.0
    %543 = vmatpush1.msra.mxu0 0.0
    %544 = vmatprep.subr.mxu0 0.0
    %545 = vmatpush1.msra.mxu0 0.0
    %546 = vmatprep.subr.mxu0 0.0
    %547 = vmatpush1.msra.mxu0 0.0
    %548 = vmatprep.mubr.f32.mxu0 0.0
    %549 = vmatmul.mubr.f32.gmra.mrb[0].mxu0 %v198
    %v550 = vpop.f32.mrb[0].mxu0
    %v551 = vadd.f32 %v181, %v550
    %v552 = vpop.f32.mrb[0].mxu0
    %v553 = vadd.f32 %v185, %v552
    %554 = vdwg.mxu0
    %v555 = vand.u32 2147483647, %v91
    %vm556 = vcmask 64512
    %v557 = vsel %vm556, %v555, 0.0
    %558 = vadd.xlane.f32.xlu0 %v557
    %v559 = vpop.xlane.xlu0 %558
    %vm560 = vcmp.gt.f32.partialorder %v559, 0.1
    %v561 = vsel %vm560, 1.0, 0.0
    %563 = vrot.lane.b32.xlu0 %v555, 120
    %v564 = vpop.permute.xlu0 %563
    %v566 = vsel %vm556, %v564, 0.0
    %567 = vadd.xlane.f32.xlu0 %v566
    %v568 = vpop.xlane.xlu0 %567
    %vm569 = vcmp.gt.f32.partialorder %v568, 0.1
    %v570 = vsel %vm569, 1.0, 0.0
    %571 = vrot.lane.b32.xlu0 %v555, 112
    %v572 = vpop.permute.xlu0 %571
    %v574 = vsel %vm556, %v572, 0.0
    %575 = vadd.xlane.f32.xlu0 %v574
    %v576 = vpop.xlane.xlu0 %575
    %vm577 = vcmp.gt.f32.partialorder %v576, 0.1
    %v578 = vsel %vm577, 1.0, 0.0
    %579 = vrot.lane.b32.xlu0 %v555, 104
    %v580 = vpop.permute.xlu0 %579
    %v582 = vsel %vm556, %v580, 0.0
    %583 = vadd.xlane.f32.xlu0 %v582
    %v584 = vpop.xlane.xlu0 %583
    %vm585 = vcmp.gt.f32.partialorder %v584, 0.1
    %v586 = vsel %vm585, 1.0, 0.0
    %587 = vrot.lane.b32.xlu0 %v555, 96
    %v588 = vpop.permute.xlu0 %587
    %v590 = vsel %vm556, %v588, 0.0
    %591 = vadd.xlane.f32.xlu0 %v590
    %v592 = vpop.xlane.xlu0 %591
    %vm593 = vcmp.gt.f32.partialorder %v592, 0.1
    %v594 = vsel %vm593, 1.0, 0.0
    %596 = vrot.lane.b32.xlu0 %v267, 64
    %v597 = vpop.permute.xlu0 %596
    %v599 = vmul.f32 %v338, %v597
    %601 = vrot.lane.b32.xlu0 %v599, 64
    %v602 = vpop.permute.xlu0 %601
    %vm604 = vcmask 523264
    %v605 = vsel %vm604, %v602, 0.0
    %606 = vadd.xlane.f32.xlu0 %v605
    %v607 = vpop.xlane.xlu0 %606
    %v608 = vmul.f32 %v607, 0.125
    %v609 = vmul.f32 %v338, %v267
    %611 = vrot.lane.b32.xlu0 %v609, 64
    %v612 = vpop.permute.xlu0 %611
    %v614 = vsel %vm604, %v612, 0.0
    %615 = vadd.xlane.f32.xlu0 %v614
    %v616 = vpop.xlane.xlu0 %615
    %v617 = vmul.f32 %v616, 0.125
    %619 = vrot.lane.b32.xlu0 %v269, 64
    %v620 = vpop.permute.xlu0 %619
    %v622 = vmul.f32 %v338, %v620
    %624 = vrot.lane.b32.xlu0 %v622, 64
    %v625 = vpop.permute.xlu0 %624
    %v627 = vsel %vm604, %v625, 0.0
    %628 = vadd.xlane.f32.xlu0 %v627
    %v629 = vpop.xlane.xlu0 %628
    %v630 = vmul.f32 %v629, 0.125
    %v631 = vmul.f32 %v338, %v269
    %633 = vrot.lane.b32.xlu0 %v631, 64
    %v634 = vpop.permute.xlu0 %633
    %v636 = vsel %vm604, %v634, 0.0
    %637 = vadd.xlane.f32.xlu0 %v636
    %v638 = vpop.xlane.xlu0 %637
    %v639 = vmul.f32 %v638, 0.125
    %641 = vrot.lane.b32.xlu0 %v338, 64
    %v642 = vpop.permute.xlu0 %641
    %v644 = vmul.f32 %v338, %v642
    %646 = vrot.lane.b32.xlu0 %v644, 64
    %v647 = vpop.permute.xlu0 %646
    %v649 = vsel %vm604, %v647, 0.0
    %650 = vadd.xlane.f32.xlu0 %v649
    %v651 = vpop.xlane.xlu0 %650
    %v652 = vmul.f32 %v651, 0.125
    %v653 = vmax.f32 %v608, %v617
    %v654 = vmax.f32 %v653, %v630
    %v655 = vmax.f32 %v654, %v639
    %v656 = vmax.f32 %v655, %v652
    %v657 = vsub.f32 %v608, %v656
    %v658 = vmul.f32 %v657, 1.442695
    %v659 = vpow.pop %v658
    %v660 = vsub.f32 %v617, %v656
    %v661 = vmul.f32 %v660, 1.442695
    %v662 = vpow.pop %v661
    %v663 = vsub.f32 %v630, %v656
    %v664 = vmul.f32 %v663, 1.442695
    %v665 = vpow.pop %v664
    %v666 = vsub.f32 %v639, %v656
    %v667 = vmul.f32 %v666, 1.442695
    %v668 = vpow.pop %v667
    %v669 = vsub.f32 %v652, %v656
    %v670 = vmul.f32 %v669, 1.442695
    %v671 = vpow.pop %v670
    %v672 = vadd.f32 %v659, %v662
    %v673 = vadd.f32 %v672, %v665
    %v674 = vadd.f32 %v673, %v668
    %v675 = vadd.f32 %v674, %v671
    %v676 = vrcp.pop %v675
    %v677 = vmul.f32 %v659, %v676
    %v678 = vmul.f32 %v677, %v411
    %v679 = vmul.f32 %v662, %v676
    %v680 = vmul.f32 %v679, %v480
    %v681 = vadd.f32 %v678, %v680
    %v682 = vmul.f32 %v665, %v676
    %v683 = vmul.f32 %v682, %v482
    %v684 = vadd.f32 %v681, %v683
    %v685 = vmul.f32 %v668, %v676
    %v686 = vmul.f32 %v685, %v551
    %v687 = vadd.f32 %v684, %v686
    %v688 = vmul.f32 %v671, %v676
    %v689 = vmul.f32 %v688, %v553
    %v690 = vadd.f32 %v687, %v689
    %v691 = vmul.f32 %v340, %v267
    %v692 = vsel %vm604, %v691, 0.0
    %693 = vadd.xlane.f32.xlu0 %v692
    %v694 = vpop.xlane.xlu0 %693
    %v695 = vmul.f32 %v694, 0.125
    %v696 = vmul.f32 %v340, %v597
    %v697 = vsel %vm604, %v696, 0.0
    %698 = vadd.xlane.f32.xlu0 %v697
    %v699 = vpop.xlane.xlu0 %698
    %v700 = vmul.f32 %v699, 0.125
    %v701 = vmul.f32 %v340, %v269
    %v702 = vsel %vm604, %v701, 0.0
    %703 = vadd.xlane.f32.xlu0 %v702
    %v704 = vpop.xlane.xlu0 %703
    %v705 = vmul.f32 %v704, 0.125
    %v706 = vmul.f32 %v340, %v620
    %v707 = vsel %vm604, %v706, 0.0
    %708 = vadd.xlane.f32.xlu0 %v707
    %v709 = vpop.xlane.xlu0 %708
    %v710 = vmul.f32 %v709, 0.125
    %v711 = vmul.f32 %v340, %v338
    %v712 = vsel %vm604, %v711, 0.0
    %713 = vadd.xlane.f32.xlu0 %v712
    %v714 = vpop.xlane.xlu0 %713
    %v715 = vmul.f32 %v714, 0.125
    %v716 = vmax.f32 %v695, %v700
    %v717 = vmax.f32 %v716, %v705
    %v718 = vmax.f32 %v717, %v710
    %v719 = vmax.f32 %v718, %v715
    %v720 = vsub.f32 %v695, %v719
    %v721 = vmul.f32 %v720, 1.442695
    %v722 = vpow.pop %v721
    %v723 = vsub.f32 %v700, %v719
    %v724 = vmul.f32 %v723, 1.442695
    %v725 = vpow.pop %v724
    %v726 = vsub.f32 %v705, %v719
    %v727 = vmul.f32 %v726, 1.442695
    %v728 = vpow.pop %v727
    %v729 = vsub.f32 %v710, %v719
    %v730 = vmul.f32 %v729, 1.442695
    %v731 = vpow.pop %v730
    %v732 = vsub.f32 %v715, %v719
    %v733 = vmul.f32 %v732, 1.442695
    %v734 = vpow.pop %v733
    %v735 = vadd.f32 %v722, %v725
    %v736 = vadd.f32 %v735, %v728
    %v737 = vadd.f32 %v736, %v731
    %v738 = vadd.f32 %v737, %v734
    %v739 = vrcp.pop %v738
    %v740 = vmul.f32 %v722, %v739
    %v741 = vmul.f32 %v740, %v411
    %v742 = vmul.f32 %v725, %v739
    %v743 = vmul.f32 %v742, %v480
    %v744 = vadd.f32 %v741, %v743
    %v745 = vmul.f32 %v728, %v739
    %v746 = vmul.f32 %v745, %v482
    %v747 = vadd.f32 %v744, %v746
    %v748 = vmul.f32 %v731, %v739
    %v749 = vmul.f32 %v748, %v551
    %v750 = vadd.f32 %v747, %v749
    %v751 = vmul.f32 %v734, %v739
    %v752 = vmul.f32 %v751, %v553
    %v753 = vadd.f32 %v750, %v752
    %755 = vrot.lane.b32.xlu0 %v696, 64
    %v756 = vpop.permute.xlu0 %755
    %v758 = vsel %vm604, %v756, 0.0
    %759 = vadd.xlane.f32.xlu0 %v758
    %v760 = vpop.xlane.xlu0 %759
    %v761 = vmul.f32 %v760, 0.125
    %763 = vrot.lane.b32.xlu0 %v691, 64
    %v764 = vpop.permute.xlu0 %763
    %v766 = vsel %vm604, %v764, 0.0
    %767 = vadd.xlane.f32.xlu0 %v766
    %v768 = vpop.xlane.xlu0 %767
    %v769 = vmul.f32 %v768, 0.125
    %771 = vrot.lane.b32.xlu0 %v706, 64
    %v772 = vpop.permute.xlu0 %771
    %v774 = vsel %vm604, %v772, 0.0
    %775 = vadd.xlane.f32.xlu0 %v774
    %v776 = vpop.xlane.xlu0 %775
    %v777 = vmul.f32 %v776, 0.125
    %779 = vrot.lane.b32.xlu0 %v701, 64
    %v780 = vpop.permute.xlu0 %779
    %v782 = vsel %vm604, %v780, 0.0
    %783 = vadd.xlane.f32.xlu0 %v782
    %v784 = vpop.xlane.xlu0 %783
    %v785 = vmul.f32 %v784, 0.125
    %v786 = vmul.f32 %v340, %v642
    %788 = vrot.lane.b32.xlu0 %v786, 64
    %v789 = vpop.permute.xlu0 %788
    %v791 = vsel %vm604, %v789, 0.0
    %792 = vadd.xlane.f32.xlu0 %v791
    %v793 = vpop.xlane.xlu0 %792
    %v794 = vmul.f32 %v793, 0.125
    %v795 = vmax.f32 %v761, %v769
    %v796 = vmax.f32 %v795, %v777
    %v797 = vmax.f32 %v796, %v785
    %v798 = vmax.f32 %v797, %v794
    %v799 = vsub.f32 %v761, %v798
    %v800 = vmul.f32 %v799, 1.442695
    %v801 = vpow.pop %v800
    %v802 = vsub.f32 %v769, %v798
    %v803 = vmul.f32 %v802, 1.442695
    %v804 = vpow.pop %v803
    %v805 = vsub.f32 %v777, %v798
    %v806 = vmul.f32 %v805, 1.442695
    %v807 = vpow.pop %v806
    %v808 = vsub.f32 %v785, %v798
    %v809 = vmul.f32 %v808, 1.442695
    %v810 = vpow.pop %v809
    %v811 = vsub.f32 %v794, %v798
    %v812 = vmul.f32 %v811, 1.442695
    %v813 = vpow.pop %v812
    %v814 = vadd.f32 %v801, %v804
    %v815 = vadd.f32 %v814, %v807
    %v816 = vadd.f32 %v815, %v810
    %v817 = vadd.f32 %v816, %v813
    %v818 = vrcp.pop %v817
    %v819 = vmul.f32 %v801, %v818
    %v820 = vmul.f32 %v819, %v411
    %v821 = vmul.f32 %v804, %v818
    %v822 = vmul.f32 %v821, %v480
    %v823 = vadd.f32 %v820, %v822
    %v824 = vmul.f32 %v807, %v818
    %v825 = vmul.f32 %v824, %v482
    %v826 = vadd.f32 %v823, %v825
    %v827 = vmul.f32 %v810, %v818
    %v828 = vmul.f32 %v827, %v551
    %v829 = vadd.f32 %v826, %v828
    %v830 = vmul.f32 %v813, %v818
    %v831 = vmul.f32 %v830, %v553
    %v832 = vadd.f32 %v829, %v831
    %v833 = vmul.f32 %v409, %v267
    %v834 = vsel %vm604, %v833, 0.0
    %835 = vadd.xlane.f32.xlu0 %v834
    %v836 = vpop.xlane.xlu0 %835
    %v837 = vmul.f32 %v836, 0.125
    %v838 = vmul.f32 %v409, %v597
    %v839 = vsel %vm604, %v838, 0.0
    %840 = vadd.xlane.f32.xlu0 %v839
    %v841 = vpop.xlane.xlu0 %840
    %v842 = vmul.f32 %v841, 0.125
    %v843 = vmul.f32 %v409, %v269
    %v844 = vsel %vm604, %v843, 0.0
    %845 = vadd.xlane.f32.xlu0 %v844
    %v846 = vpop.xlane.xlu0 %845
    %v847 = vmul.f32 %v846, 0.125
    %v848 = vmul.f32 %v409, %v620
    %v849 = vsel %vm604, %v848, 0.0
    %850 = vadd.xlane.f32.xlu0 %v849
    %v851 = vpop.xlane.xlu0 %850
    %v852 = vmul.f32 %v851, 0.125
    %v853 = vmul.f32 %v409, %v338
    %v854 = vsel %vm604, %v853, 0.0
    %855 = vadd.xlane.f32.xlu0 %v854
    %v856 = vpop.xlane.xlu0 %855
    %v857 = vmul.f32 %v856, 0.125
    %v858 = vmax.f32 %v837, %v842
    %v859 = vmax.f32 %v858, %v847
    %v860 = vmax.f32 %v859, %v852
    %v861 = vmax.f32 %v860, %v857
    %v862 = vsub.f32 %v837, %v861
    %v863 = vmul.f32 %v862, 1.442695
    %v864 = vpow.pop %v863
    %v865 = vsub.f32 %v842, %v861
    %v866 = vmul.f32 %v865, 1.442695
    %v867 = vpow.pop %v866
    %v868 = vsub.f32 %v847, %v861
    %v869 = vmul.f32 %v868, 1.442695
    %v870 = vpow.pop %v869
    %v871 = vsub.f32 %v852, %v861
    %v872 = vmul.f32 %v871, 1.442695
    %v873 = vpow.pop %v872
    %v874 = vsub.f32 %v857, %v861
    %v875 = vmul.f32 %v874, 1.442695
    %v876 = vpow.pop %v875
    %v877 = vadd.f32 %v864, %v867
    %v878 = vadd.f32 %v877, %v870
    %v879 = vadd.f32 %v878, %v873
    %v880 = vadd.f32 %v879, %v876
    %v881 = vrcp.pop %v880
    %v882 = vmul.f32 %v864, %v881
    %v883 = vmul.f32 %v882, %v411
    %v884 = vmul.f32 %v867, %v881
    %v885 = vmul.f32 %v884, %v480
    %v886 = vadd.f32 %v883, %v885
    %v887 = vmul.f32 %v870, %v881
    %v888 = vmul.f32 %v887, %v482
    %v889 = vadd.f32 %v886, %v888
    %v890 = vmul.f32 %v873, %v881
    %v891 = vmul.f32 %v890, %v551
    %v892 = vadd.f32 %v889, %v891
    %v893 = vmul.f32 %v876, %v881
    %v894 = vmul.f32 %v893, %v553
    %v895 = vadd.f32 %v892, %v894
    %897 = vrot.lane.b32.xlu0 %v838, 64
    %v898 = vpop.permute.xlu0 %897
    %v900 = vsel %vm604, %v898, 0.0
    %901 = vadd.xlane.f32.xlu0 %v900
    %v902 = vpop.xlane.xlu0 %901
    %v903 = vmul.f32 %v902, 0.125
    %905 = vrot.lane.b32.xlu0 %v833, 64
    %v906 = vpop.permute.xlu0 %905
    %v908 = vsel %vm604, %v906, 0.0
    %909 = vadd.xlane.f32.xlu0 %v908
    %v910 = vpop.xlane.xlu0 %909
    %v911 = vmul.f32 %v910, 0.125
    %913 = vrot.lane.b32.xlu0 %v848, 64
    %v914 = vpop.permute.xlu0 %913
    %v916 = vsel %vm604, %v914, 0.0
    %917 = vadd.xlane.f32.xlu0 %v916
    %v918 = vpop.xlane.xlu0 %917
    %v919 = vmul.f32 %v918, 0.125
    %921 = vrot.lane.b32.xlu0 %v843, 64
    %v922 = vpop.permute.xlu0 %921
    %v924 = vsel %vm604, %v922, 0.0
    %925 = vadd.xlane.f32.xlu0 %v924
    %v926 = vpop.xlane.xlu0 %925
    %v927 = vmul.f32 %v926, 0.125
    %v928 = vmul.f32 %v409, %v642
    %930 = vrot.lane.b32.xlu0 %v928, 64
    %v931 = vpop.permute.xlu0 %930
    %v933 = vsel %vm604, %v931, 0.0
    %934 = vadd.xlane.f32.xlu0 %v933
    %v935 = vpop.xlane.xlu0 %934
    %v936 = vmul.f32 %v935, 0.125
    %v937 = vmax.f32 %v903, %v911
    %v938 = vmax.f32 %v937, %v919
    %v939 = vmax.f32 %v938, %v927
    %v940 = vmax.f32 %v939, %v936
    %v941 = vsub.f32 %v903, %v940
    %v942 = vmul.f32 %v941, 1.442695
    %v943 = vpow.pop %v942
    %v944 = vsub.f32 %v911, %v940
    %v945 = vmul.f32 %v944, 1.442695
    %v946 = vpow.pop %v945
    %v947 = vsub.f32 %v919, %v940
    %v948 = vmul.f32 %v947, 1.442695
    %v949 = vpow.pop %v948
    %v950 = vsub.f32 %v927, %v940
    %v951 = vmul.f32 %v950, 1.442695
    %v952 = vpow.pop %v951
    %v953 = vsub.f32 %v936, %v940
    %v954 = vmul.f32 %v953, 1.442695
    %v955 = vpow.pop %v954
    %v956 = vadd.f32 %v943, %v946
    %v957 = vadd.f32 %v956, %v949
    %v958 = vadd.f32 %v957, %v952
    %v959 = vadd.f32 %v958, %v955
    %v960 = vrcp.pop %v959
    %v961 = vmul.f32 %v943, %v960
    %v962 = vmul.f32 %v961, %v411
    %v963 = vmul.f32 %v946, %v960
    %v964 = vmul.f32 %v963, %v480
    %v965 = vadd.f32 %v962, %v964
    %v966 = vmul.f32 %v949, %v960
    %v967 = vmul.f32 %v966, %v482
    %v968 = vadd.f32 %v965, %v967
    %v969 = vmul.f32 %v952, %v960
    %v970 = vmul.f32 %v969, %v551
    %v971 = vadd.f32 %v968, %v970
    %v972 = vmul.f32 %v955, %v960
    %v973 = vmul.f32 %v972, %v553
    %v974 = vadd.f32 %v971, %v973
    %v975 = vmul.f32 %v690, %v561
    %v976 = vmul.f32 %v753, %v570
    %v977 = vadd.f32 %v975, %v976
    %v978 = vadd.f32 %v561, %v570
    %v979 = vmul.f32 %v832, %v578
    %v980 = vadd.f32 %v977, %v979
    %v981 = vadd.f32 %v978, %v578
    %v982 = vmul.f32 %v895, %v586
    %v983 = vadd.f32 %v980, %v982
    %v984 = vadd.f32 %v981, %v586
    %v985 = vmul.f32 %v974, %v594
    %v986 = vadd.f32 %v983, %v985
    %v987 = vadd.f32 %v984, %v594
    %v988 = vadd.f32 %v987, 1e-08
    %v989 = vrcp.pop %v988
    %v990 = vmul.f32 %v986, %v989
    %v991 = vld [vmem:[#allocation8] sm:$0xff]
    %v992 = vld [vmem:[#allocation8 + $0x8] sm:$0xff]
    %v993 = vld [vmem:[#allocation8 + $0x10] sm:$0xff]
    %v994 = vld [vmem:[#allocation8 + $0x18] sm:$0xff]
    %v995 = vld [vmem:[#allocation8 + $0x20] sm:$0xff]
    %v996 = vld [vmem:[#allocation8 + $0x28] sm:$0xff]
    %v997 = vld [vmem:[#allocation8 + $0x30] sm:$0xff]
    %v998 = vld [vmem:[#allocation8 + $0x38] sm:$0xff]
    %v999 = vld [vmem:[#allocation8 + $0x40] sm:$0xff]
    %v1000 = vld [vmem:[#allocation8 + $0x48] sm:$0xff]
    %v1001 = vld [vmem:[#allocation8 + $0x50] sm:$0xff]
    %v1002 = vld [vmem:[#allocation8 + $0x58] sm:$0xff]
    %v1003 = vld [vmem:[#allocation8 + $0x60] sm:$0xff]
    %v1004 = vld [vmem:[#allocation8 + $0x68] sm:$0xff]
    %v1005 = vld [vmem:[#allocation8 + $0x70] sm:$0xff]
    %v1006 = vld [vmem:[#allocation8 + $0x78] sm:$0xff]
    %v1007 = vld [vmem:[#allocation8 + $0x80] sm:$0xff]
    %v1008 = vld [vmem:[#allocation8 + $0x88] sm:$0xff]
    %v1009 = vld [vmem:[#allocation8 + $0x90] sm:$0xff]
    %v1010 = vld [vmem:[#allocation8 + $0x98] sm:$0xff]
    %v1011 = vld [vmem:[#allocation8 + $0xa0] sm:$0xff]
    %v1012 = vld [vmem:[#allocation8 + $0xa8] sm:$0xff]
    %v1013 = vld [vmem:[#allocation8 + $0xb0] sm:$0xff]
    %v1014 = vld [vmem:[#allocation8 + $0xb8] sm:$0xff]
    %v1015 = vld [vmem:[#allocation8 + $0xc0] sm:$0xff]
    %v1016 = vld [vmem:[#allocation8 + $0xc8] sm:$0xff]
    %v1017 = vld [vmem:[#allocation8 + $0xd0] sm:$0xff]
    %v1018 = vld [vmem:[#allocation8 + $0xd8] sm:$0xff]
    %v1019 = vld [vmem:[#allocation8 + $0xe0] sm:$0xff]
    %v1020 = vld [vmem:[#allocation8 + $0xe8] sm:$0xff]
    %v1021 = vld [vmem:[#allocation8 + $0xf0] sm:$0xff]
    %v1022 = vld [vmem:[#allocation8 + $0xf8] sm:$0xff]
    %v1023 = vld [vmem:[%s4] sm:$0x3]
    %v1025 = vlaneseq
    %v1026 = vshrl.u32 %v1025, 7
    %v1027 = vsub.s32 0, %v1026
    %v1028 = vrot.slane %v1023, %v1027
    %v1029 = vlaneseq
    %v1030 = vshrl.u32 %v1029, 7
    %v1031 = vsub.s32 1, %v1030
    %v1032 = vrot.slane %v1023, %v1031
    %1035 = vmatprep.subr.mxu0 %v992
    %1036 = vmatpush1.msra.mxu0 %v991
    %1037 = vmatprep.subr.mxu0 %v994
    %1038 = vmatpush1.msra.mxu0 %v993
    %1039 = vmatprep.subr.mxu0 %v996
    %1040 = vmatpush1.msra.mxu0 %v995
    %1041 = vmatprep.subr.mxu0 %v998
    %1042 = vmatpush1.msra.mxu0 %v997
    %1043 = vmatprep.subr.mxu0 %v1000
    %1044 = vmatpush1.msra.mxu0 %v999
    %1045 = vmatprep.subr.mxu0 %v1002
    %1046 = vmatpush1.msra.mxu0 %v1001
    %1047 = vmatprep.subr.mxu0 %v1004
    %1048 = vmatpush1.msra.mxu0 %v1003
    %1049 = vmatprep.subr.mxu0 %v1006
    %1050 = vmatpush1.msra.mxu0 %v1005
    %1051 = vmatprep.subr.mxu0 %v1008
    %1052 = vmatpush1.msra.mxu0 %v1007
    %1053 = vmatprep.subr.mxu0 %v1010
    %1054 = vmatpush1.msra.mxu0 %v1009
    %1055 = vmatprep.subr.mxu0 %v1012
    %1056 = vmatpush1.msra.mxu0 %v1011
    %1057 = vmatprep.subr.mxu0 %v1014
    %1058 = vmatpush1.msra.mxu0 %v1013
    %1059 = vmatprep.subr.mxu0 %v1016
    %1060 = vmatpush1.msra.mxu0 %v1015
    %1061 = vmatprep.subr.mxu0 %v1018
    %1062 = vmatpush1.msra.mxu0 %v1017
    %1063 = vmatprep.subr.mxu0 %v1020
    %1064 = vmatpush1.msra.mxu0 %v1019
    %1065 = vmatprep.subr.mxu0 %v1022
    %1066 = vmatpush1.msra.mxu0 %v1021
    %1067 = vmatprep.subr.mxu0 0.0
    %1068 = vmatpush1.msra.mxu0 0.0
    %1069 = vmatprep.subr.mxu0 0.0
    %1070 = vmatpush1.msra.mxu0 0.0
    %1071 = vmatprep.subr.mxu0 0.0
    %1072 = vmatpush1.msra.mxu0 0.0
    %1073 = vmatprep.subr.mxu0 0.0
    %1074 = vmatpush1.msra.mxu0 0.0
    %1075 = vmatprep.subr.mxu0 0.0
    %1076 = vmatpush1.msra.mxu0 0.0
    %1077 = vmatprep.subr.mxu0 0.0
    %1078 = vmatpush1.msra.mxu0 0.0
    %1079 = vmatprep.subr.mxu0 0.0
    %1080 = vmatpush1.msra.mxu0 0.0
    %1081 = vmatprep.subr.mxu0 0.0
    %1082 = vmatpush1.msra.mxu0 0.0
    %1083 = vmatprep.subr.mxu0 0.0
    %1084 = vmatpush1.msra.mxu0 0.0
    %1085 = vmatprep.subr.mxu0 0.0
    %1086 = vmatpush1.msra.mxu0 0.0
    %1087 = vmatprep.subr.mxu0 0.0
    %1088 = vmatpush1.msra.mxu0 0.0
    %1089 = vmatprep.subr.mxu0 0.0
    %1090 = vmatpush1.msra.mxu0 0.0
    %1091 = vmatprep.subr.mxu0 0.0
    %1092 = vmatpush1.msra.mxu0 0.0
    %1093 = vmatprep.subr.mxu0 0.0
    %1094 = vmatpush1.msra.mxu0 0.0
    %1095 = vmatprep.subr.mxu0 0.0
    %1096 = vmatpush1.msra.mxu0 0.0
    %1097 = vmatprep.subr.mxu0 0.0
    %1098 = vmatpush1.msra.mxu0 0.0
    %1099 = vmatprep.mubr.f32.mxu0 0.0
    %1100 = vmatmul.mubr.f32.gmra.mrb[0].mxu0 %v990
    %v1101 = vpop.f32.mrb[0].mxu0
    %v1102 = vadd.f32 %v1028, %v1101
    %v1103 = vpop.f32.mrb[0].mxu0
    %v1104 = vadd.f32 %v1032, %v1103
    %1105 = vdwg.mxu0
    %v1106 = vmul.f32 %v1102, 0.5
    %v1107 = vmul.f32 %v1104, 0.5
    %v1108 = vmul.f32 %v1102, %v1102
    %v1109 = vmul.f32 %v1104, %v1104
    %v1110 = vmul.f32 %v1108, %v1102
    %v1111 = vmul.f32 %v1109, %v1104
    %v1112 = vmul.f32 %v1110, 0.044715
    %v1113 = vmul.f32 %v1111, 0.044715
    %v1114 = vadd.f32 %v1102, %v1112
    %v1115 = vadd.f32 %v1104, %v1113
    %v1116 = vmul.f32 %v1114, 0.7978846
    %v1117 = vmul.f32 %v1115, 0.7978846
    %v1118 = vtanh.pop %v1116
    %v1119 = vtanh.pop %v1117
    %v1120 = vadd.f32 %v1118, 1.0
    %v1121 = vadd.f32 %v1119, 1.0
    %v1122 = vmul.f32 %v1106, %v1120
    %v1123 = vmul.f32 %v1107, %v1121
    %v1124 = vld [vmem:[#allocation10] sm:$0xff]
    %v1125 = vld [vmem:[#allocation10 + $0x8] sm:$0xff]
    %v1126 = vld [vmem:[#allocation10 + $0x10] sm:$0xff]
    %v1127 = vld [vmem:[#allocation10 + $0x18] sm:$0xff]
    %v1128 = vld [vmem:[#allocation10 + $0x20] sm:$0xff]
    %v1129 = vld [vmem:[#allocation10 + $0x28] sm:$0xff]
    %v1130 = vld [vmem:[#allocation10 + $0x30] sm:$0xff]
    %v1131 = vld [vmem:[#allocation10 + $0x38] sm:$0xff]
    %v1132 = vld [vmem:[#allocation10 + $0x40] sm:$0xff]
    %v1133 = vld [vmem:[#allocation10 + $0x48] sm:$0xff]
    %v1134 = vld [vmem:[#allocation10 + $0x50] sm:$0xff]
    %v1135 = vld [vmem:[#allocation10 + $0x58] sm:$0xff]
    %v1136 = vld [vmem:[#allocation10 + $0x60] sm:$0xff]
    %v1137 = vld [vmem:[#allocation10 + $0x68] sm:$0xff]
    %v1138 = vld [vmem:[#allocation10 + $0x70] sm:$0xff]
    %v1139 = vld [vmem:[#allocation10 + $0x78] sm:$0xff]
    %v1140 = vld [vmem:[#allocation10 + $0x80] sm:$0xff]
    %v1141 = vld [vmem:[#allocation10 + $0x88] sm:$0xff]
    %v1142 = vld [vmem:[#allocation10 + $0x90] sm:$0xff]
    %v1143 = vld [vmem:[#allocation10 + $0x98] sm:$0xff]
    %v1144 = vld [vmem:[#allocation10 + $0xa0] sm:$0xff]
    %v1145 = vld [vmem:[#allocation10 + $0xa8] sm:$0xff]
    %v1146 = vld [vmem:[#allocation10 + $0xb0] sm:$0xff]
    %v1147 = vld [vmem:[#allocation10 + $0xb8] sm:$0xff]
    %v1148 = vld [vmem:[#allocation10 + $0xc0] sm:$0xff]
    %v1149 = vld [vmem:[#allocation10 + $0xc8] sm:$0xff]
    %v1150 = vld [vmem:[#allocation10 + $0xd0] sm:$0xff]
    %v1151 = vld [vmem:[#allocation10 + $0xd8] sm:$0xff]
    %v1152 = vld [vmem:[#allocation10 + $0xe0] sm:$0xff]
    %v1153 = vld [vmem:[#allocation10 + $0xe8] sm:$0xff]
    %v1154 = vld [vmem:[#allocation10 + $0xf0] sm:$0xff]
    %v1155 = vld [vmem:[#allocation10 + $0xf8] sm:$0xff]
    %v1156 = vld [vmem:[%s6] sm:$0x1]
    %v1158 = vlaneseq
    %v1159 = vshrl.u32 %v1158, 7
    %v1160 = vsub.s32 0, %v1159
    %v1161 = vrot.slane %v1156, %v1160
    %1163 = vmatprep.subr.mxu0 0.0
    %1164 = vmatpush1.msra.mxu0 %v1124
    %1165 = vmatprep.subr.mxu0 0.0
    %1166 = vmatpush1.msra.mxu0 %v1125
    %1167 = vmatprep.subr.mxu0 0.0
    %1168 = vmatpush1.msra.mxu0 %v1126
    %1169 = vmatprep.subr.mxu0 0.0
    %1170 = vmatpush1.msra.mxu0 %v1127
    %1171 = vmatprep.subr.mxu0 0.0
    %1172 = vmatpush1.msra.mxu0 %v1128
    %1173 = vmatprep.subr.mxu0 0.0
    %1174 = vmatpush1.msra.mxu0 %v1129
    %1175 = vmatprep.subr.mxu0 0.0
    %1176 = vmatpush1.msra.mxu0 %v1130
    %1177 = vmatprep.subr.mxu0 0.0
    %1178 = vmatpush1.msra.mxu0 %v1131
    %1179 = vmatprep.subr.mxu0 0.0
    %1180 = vmatpush1.msra.mxu0 %v1132
    %1181 = vmatprep.subr.mxu0 0.0
    %1182 = vmatpush1.msra.mxu0 %v1133
    %1183 = vmatprep.subr.mxu0 0.0
    %1184 = vmatpush1.msra.mxu0 %v1134
    %1185 = vmatprep.subr.mxu0 0.0
    %1186 = vmatpush1.msra.mxu0 %v1135
    %1187 = vmatprep.subr.mxu0 0.0
    %1188 = vmatpush1.msra.mxu0 %v1136
    %1189 = vmatprep.subr.mxu0 0.0
    %1190 = vmatpush1.msra.mxu0 %v1137
    %1191 = vmatprep.subr.mxu0 0.0
    %1192 = vmatpush1.msra.mxu0 %v1138
    %1193 = vmatprep.subr.mxu0 0.0
    %1194 = vmatpush1.msra.mxu0 %v1139
    %1195 = vmatprep.subr.mxu0 0.0
    %1196 = vmatpush1.msra.mxu0 %v1140
    %1197 = vmatprep.subr.mxu0 0.0
    %1198 = vmatpush1.msra.mxu0 %v1141
    %1199 = vmatprep.subr.mxu0 0.0
    %1200 = vmatpush1.msra.mxu0 %v1142
    %1201 = vmatprep.subr.mxu0 0.0
    %1202 = vmatpush1.msra.mxu0 %v1143
    %1203 = vmatprep.subr.mxu0 0.0
    %1204 = vmatpush1.msra.mxu0 %v1144
    %1205 = vmatprep.subr.mxu0 0.0
    %1206 = vmatpush1.msra.mxu0 %v1145
    %1207 = vmatprep.subr.mxu0 0.0
    %1208 = vmatpush1.msra.mxu0 %v1146
    %1209 = vmatprep.subr.mxu0 0.0
    %1210 = vmatpush1.msra.mxu0 %v1147
    %1211 = vmatprep.subr.mxu0 0.0
    %1212 = vmatpush1.msra.mxu0 %v1148
    %1213 = vmatprep.subr.mxu0 0.0
    %1214 = vmatpush1.msra.mxu0 %v1149
    %1215 = vmatprep.subr.mxu0 0.0
    %1216 = vmatpush1.msra.mxu0 %v1150
    %1217 = vmatprep.subr.mxu0 0.0
    %1218 = vmatpush1.msra.mxu0 %v1151
    %1219 = vmatprep.subr.mxu0 0.0
    %1220 = vmatpush1.msra.mxu0 %v1152
    %1221 = vmatprep.subr.mxu0 0.0
    %1222 = vmatpush1.msra.mxu0 %v1153
    %1223 = vmatprep.subr.mxu0 0.0
    %1224 = vmatpush1.msra.mxu0 %v1154
    %1225 = vmatprep.subr.mxu0 0.0
    %1226 = vmatpush1.msra.mxu0 %v1155
    %1227 = vmatprep.mubr.f32.mxu0 %v1123
    %1228 = vmatmul.mubr.f32.gmra.mrb[0].mxu0 %v1122
    %v1229 = vpop.f32.mrb[0].mxu0
    %v1230 = vadd.f32 %v1161, %v1229
    %v1231 = vpop.f32.mrb[0].mxu0
    %1232 = vdwg.mxu0
    %1233 = vst [vmem:[#allocation11] sm:$0xff] %v1230
    // Predicated region
    $region50: #{tpu_custom_call.1} parent=1 // pred_check
      _
    $region51: #{tpu_custom_call.1} parent=1 // pred_check_branch
      %1235 = sbr.rel (0) target = $region53
    $region52: #{tpu_custom_call.1} parent=1 // pred_region
      %s1237 = ssub.s32 128, 128
      %1238 = vsyncadd [#allocation4], %s1237
      %s1240 = sshll.u32 [#allocation11], 4
      %s1241 = int_to_ptr.vmem [resolvable:$true] %s1240
      %1243 = dma.vmem_to_hbm [thread:$0]  %s1241, 128, %s7, [#allocation4]
    $region53: #{tpu_custom_call.1} parent=1 // pred_fallthru
      _
    // Predicated region
    $region54: #{tpu_custom_call.1} parent=1 // pred_check
      _
    $region55: #{tpu_custom_call.1} parent=1 // pred_check_branch
      %1245 = sbr.rel (0) target = $region57
    $region56: #{tpu_custom_call.1} parent=1 // pred_region
      %1246 = dma.done [#allocation4], 128
    $region57: #{tpu_custom_call.1} parent=1 // pred_fallthru
      _
    %1247 = vsyncpa [#allocation3], 1
    %1248 = vsyncpa [#allocation6], 1
    %1249 = vsyncpa [#allocation9], 1
    %1250 = vsyncpa [#allocation4], 1

</llo_original>
